<compile_context>
chip_gen: v7x
topology: tpu7x:2x2x1
jax: 0.10.0
libtpu: 0.0.40
codegen_flags: <defaults>
</compile_context>

<pallas_src>
import math
from functools import partial

import jax
import jax.numpy as jnp
from jax.experimental import pallas as pl
from jax.experimental.pallas import tpu as pltpu

EPS = 1e-5  # BatchNorm1d default eps


def _rnd8(v):
    return (v + 7) // 8 * 8


# -----------------------------------------------------------------------------
# Kernel factory: closes over static shape ints and slab row offsets only.
# -----------------------------------------------------------------------------
def _make_kernel(*, N, L1, C_in, F, NC, offs):
    NL = N * L1
    (r_w1, r_w2, r_w3, r_fw1, r_fw2, r_b1, r_b2, r_b3, r_fb1, r_fb2) = offs
    f32 = jnp.float32

    def kernel(xcol_ref, slab_ref, out_ref, cols2_ref, cols3_ref):
        # ---- static views into the packed parameter slab ---------------------
        w1 = slab_ref[r_w1:r_w1 + F, 0:3 * C_in]            # (F,   3*C_in)
        w2 = slab_ref[r_w2:r_w2 + 2 * F, 0:3 * F]            # (2F,  3F)
        w3 = slab_ref[r_w3:r_w3 + 3 * F, 0:6 * F]            # (3F,  6F)
        fw1 = slab_ref[r_fw1:r_fw1 + 3 * F, 0:3 * F]         # (3F,  3F)
        fw2 = slab_ref[r_fw2:r_fw2 + NC, 0:3 * F]            # (NC,  3F)
        b1 = slab_ref[r_b1:r_b1 + F, 0:1]                    # (F, 1) columns
        b2 = slab_ref[r_b2:r_b2 + 2 * F, 0:1]
        b3 = slab_ref[r_b3:r_b3 + 3 * F, 0:1]
        fb1 = slab_ref[r_fb1:r_fb1 + 3 * F, 0:1]
        fb2 = slab_ref[r_fb2:r_fb2 + NC, 0:1]

        # ---- in-kernel shift operators (iota + compares, nothing DMA'd) ------
        # left[c,l]  = h[c,l-1] within the same sample else 0
        # right[c,l] = h[c,l+1] within the same sample else 0
        pio = jax.lax.broadcasted_iota(jnp.int32, (NL, NL), 0)   # source pos
        lio = jax.lax.broadcasted_iota(jnp.int32, (NL, NL), 1)   # dest pos
        sl_m = pio == lio - 1
        sr_m = pio == lio + 1
        for n in range(1, N):          # zero out the N-1 interior sample seams
            sl_m = sl_m & (lio != n * L1)
            sr_m = sr_m & (lio != n * L1 - 1)
        sl = jnp.where(sl_m, 1.0, 0.0).astype(f32)
        sr = jnp.where(sr_m, 1.0, 0.0).astype(f32)

        # ---- initial_conv (k=3, pad=4) + ReLU: single stacked-tap matmul -----
        h1 = jnp.dot(w1, xcol_ref[...], preferred_element_type=f32)
        h1 = jnp.maximum(h1 + b1, 0.0)                        # (F, NL)

        def conv3(h, w, b, cols_ref, c):
            # im2col rows [h[l-1]; h[l]; h[l+1]] assembled into VMEM scratch at
            # static sublane offsets (no concatenate copy); taps stacked along
            # the contraction dim -> ONE MXU matmul per conv layer.
            left = jnp.dot(h, sl, preferred_element_type=f32)
            right = jnp.dot(h, sr, preferred_element_type=f32)
            cols_ref[0:c, :] = left
            cols_ref[c:2 * c, :] = h
            cols_ref[2 * c:3 * c, :] = right
            return jnp.dot(w, cols_ref[...], preferred_element_type=f32) + b

        def batchnorm(h):
            # Training-mode BN over (N, L) == the lane axis; biased variance,
            # gamma=1, beta=0.  mean(h) and mean(h*h) are independent
            # reductions, so the two XLU reduces can overlap.
            mu = jnp.mean(h, axis=1, keepdims=True)
            m2 = jnp.mean(h * h, axis=1, keepdims=True)
            var = m2 - mu * mu
            return (h - mu) * jax.lax.rsqrt(var + EPS)

        h2 = batchnorm(conv3(h1, w2, b2, cols2_ref, F))       # (2F, NL)
        h3 = batchnorm(conv3(h2, w3, b3, cols3_ref, 2 * F))   # (3F, NL)

        # ---- per-sample mean over length (in-kernel pooling operator) --------
        pio2 = jax.lax.broadcasted_iota(jnp.int32, (NL, N), 0)
        nio2 = jax.lax.broadcasted_iota(jnp.int32, (NL, N), 1)
        pool = jnp.where((pio2 >= nio2 * L1) & (pio2 < (nio2 + 1) * L1),
                         1.0, 0.0).astype(f32)                # (NL, N)
        feat = jnp.dot(h3, pool, preferred_element_type=f32) * (1.0 / L1)

        # ---- fc_layer, fc_layer2 (channel-major) ------------------------------
        z = jnp.dot(fw1, feat, preferred_element_type=f32) + fb1   # (3F, N)
        out = jnp.dot(fw2, z, preferred_element_type=f32) + fb2    # (NC, N)
        out_ref[...] = out.astype(out_ref.dtype)

    return kernel


# -----------------------------------------------------------------------------
# Jitted wrapper: layout glue (im2col + single packed parameter slab) + call.
# -----------------------------------------------------------------------------
@partial(jax.jit, static_argnames=("num_features", "num_classes"))
def pers_model_forward(x, params, *, num_features=16, num_classes=5):
    """x: (N, C_in, L) float32. Returns (N, num_classes)."""
    N, C_in, L = x.shape
    F, NC = num_features, num_classes
    PAD1 = 4
    L1 = L + 2 * PAD1 - 2          # initial_conv output length (k=3, s=1, pad=4)
    NL = N * L1

    x = x.astype(jnp.float32)

    # im2col of the input for layer 1 (pure layout glue, fused under jit):
    # row = k*C_in + c, col = n*L1 + l, value = x_pad[n, c, l + k].
    x_pad = jnp.pad(x, ((0, 0), (0, 0), (PAD1, PAD1)))
    taps = jnp.stack([x_pad[:, :, k:k + L1] for k in range(3)], axis=0)
    xcol = jnp.transpose(taps, (0, 2, 1, 3)).reshape(3 * C_in, NL)

    # Conv weights: torch (C_out, C_in, K) -> (C_out, K*C_in), col = k*C_in + c.
    def flat_w(w):
        return jnp.transpose(w, (0, 2, 1)).reshape(w.shape[0], 3 * w.shape[1])

    # Packed parameter slab: weights at 8-aligned row offsets (cols [0,width)),
    # biases stacked in column 0 of a trailing row block.
    r_w1 = 0
    r_w2 = r_w1 + _rnd8(F)
    r_w3 = r_w2 + _rnd8(2 * F)
    r_fw1 = r_w3 + _rnd8(3 * F)
    r_fw2 = r_fw1 + _rnd8(3 * F)
    r_b1 = r_fw2 + _rnd8(NC)
    r_b2 = r_b1 + _rnd8(F)
    r_b3 = r_b2 + _rnd8(2 * F)
    r_fb1 = r_b3 + _rnd8(3 * F)
    r_fb2 = r_fb1 + _rnd8(3 * F)
    rows = r_fb2 + _rnd8(NC)
    width = (max(3 * C_in, 6 * F) + 127) // 128 * 128

    slab = jnp.zeros((rows, width), jnp.float32)
    slab = slab.at[r_w1:r_w1 + F, :3 * C_in].set(flat_w(params["w1"]))
    slab = slab.at[r_w2:r_w2 + 2 * F, :3 * F].set(flat_w(params["w2"]))
    slab = slab.at[r_w3:r_w3 + 3 * F, :6 * F].set(flat_w(params["w3"]))
    slab = slab.at[r_fw1:r_fw1 + 3 * F, :3 * F].set(params["fw1"])
    slab = slab.at[r_fw2:r_fw2 + NC, :3 * F].set(params["fw2"])
    slab = slab.at[r_b1:r_b1 + F, 0].set(params["b1"])
    slab = slab.at[r_b2:r_b2 + 2 * F, 0].set(params["b2"])
    slab = slab.at[r_b3:r_b3 + 3 * F, 0].set(params["b3"])
    slab = slab.at[r_fb1:r_fb1 + 3 * F, 0].set(params["fb1"])
    slab = slab.at[r_fb2:r_fb2 + NC, 0].set(params["fb2"])

    kernel = _make_kernel(
        N=N, L1=L1, C_in=C_in, F=F, NC=NC,
        offs=(r_w1, r_w2, r_w3, r_fw1, r_fw2, r_b1, r_b2, r_b3, r_fb1, r_fb2))

    vmem = pl.BlockSpec(memory_space=pltpu.MemorySpace.VMEM)
    out_cn = pl.pallas_call(
        kernel,
        out_shape=jax.ShapeDtypeStruct((NC, N), jnp.float32),
        in_specs=[vmem, vmem],
        out_specs=vmem,
        scratch_shapes=[pltpu.VMEM((3 * F, NL), jnp.float32),   # im2col, conv2
                        pltpu.VMEM((6 * F, NL), jnp.float32)],  # im2col, conv3
    )(xcol, slab)
    # (NC, N) -> (N, NC): a trivial transpose fused into the jitted graph.
    return out_cn.T


# -----------------------------------------------------------------------------
# Deterministic parameter init (matches PyTorch _initialize_weights: xavier
# uniform for conv/linear weights, zeros for biases; BN gamma=1/beta=0 implied).
# -----------------------------------------------------------------------------
def xavier_uniform(key, shape, fan_in, fan_out):
    bound = math.sqrt(6.0 / (fan_in + fan_out))
    return jax.random.uniform(key, shape, jnp.float32, -bound, bound)


def init_params(key, input_channels=6, num_classes=5, num_features=16):
    F = num_features
    k = jax.random.split(key, 5)
    return {
        "w1": xavier_uniform(k[0], (F, input_channels, 3),
                             input_channels * 3, F * 3),
        "b1": jnp.zeros((F,), jnp.float32),
        "w2": xavier_uniform(k[1], (2 * F, F, 3), F * 3, 2 * F * 3),
        "b2": jnp.zeros((2 * F,), jnp.float32),
        "w3": xavier_uniform(k[2], (3 * F, 2 * F, 3), 2 * F * 3, 3 * F * 3),
        "b3": jnp.zeros((3 * F,), jnp.float32),
        "fw1": xavier_uniform(k[3], (3 * F, 3 * F), 3 * F, 3 * F),
        "fb1": jnp.zeros((3 * F,), jnp.float32),
        "fw2": xavier_uniform(k[4], (num_classes, 3 * F), 3 * F, num_classes),
        "fb2": jnp.zeros((num_classes,), jnp.float32),
    }


# -----------------------------------------------------------------------------
# Pure-JAX reference for the correctness check (same math, XLA conv ops).
# -----------------------------------------------------------------------------
def ref_forward(x, p):
    def conv1d(h, w, b, pad):
        y = jax.lax.conv_general_dilated(
            h, w, window_strides=(1,), padding=[(pad, pad)],
            dimension_numbers=("NCH", "OIH", "NCH"))
        return y + b[None, :, None]

    def bn(h):
        mu = jnp.mean(h, axis=(0, 2), keepdims=True)
        var = jnp.mean((h - mu) ** 2, axis=(0, 2), keepdims=True)
        return (h - mu) / jnp.sqrt(var + EPS)

    h = jax.nn.relu(conv1d(x, p["w1"], p["b1"], 4))
    h = bn(conv1d(h, p["w2"], p["b2"], 1))
    h = bn(conv1d(h, p["w3"], p["b3"], 1))
    feat = jnp.mean(h, axis=2)
    z = feat @ p["fw1"].T + p["fb1"]
    return z @ p["fw2"].T + p["fb2"]


if __name__ == "__main__":
    key = jax.random.PRNGKey(0)
    pkey, xkey = jax.random.split(key)

    N, C_IN, L = 2, 6, 16
    NUM_CLASSES, NUM_FEATURES = 5, 16

    params = init_params(pkey, C_IN, NUM_CLASSES, NUM_FEATURES)
    x = jax.random.normal(xkey, (N, C_IN, L), jnp.float32)

    out = pers_model_forward(x, params,
                             num_features=NUM_FEATURES, num_classes=NUM_CLASSES)
    out = jax.block_until_ready(out)

    ref = jax.block_until_ready(ref_forward(x, params))
    assert out.shape == (N, NUM_CLASSES)
    assert jnp.all(jnp.isfinite(out))
    assert jnp.allclose(out, ref, atol=1e-3, rtol=1e-3), (out, ref)

    print("KERNEL_OK")
</pallas_src>

<mosaic_0001>
module attributes {stable_mosaic.version = 11 : i64} {
  func.func @kernel(%arg0: memref<18x44xf32, #tpu.memory_space<vmem>>, %arg1: memref<304x128xf32, #tpu.memory_space<vmem>>, %arg2: memref<5x2xf32, #tpu.memory_space<vmem>>, %arg3: memref<48x44xf32, #tpu.memory_space<vmem>>, %arg4: memref<96x44xf32, #tpu.memory_space<vmem>>) attributes {dimension_semantics = [], scalar_prefetch = 0 : i64, scratch_operands = 2 : i64, tpu.core_type = #tpu.core_type<tc>} {
    %c0 = arith.constant 0 : index
    %c0_0 = arith.constant 0 : index
    %0 = vector.load %arg1[%c0, %c0_0] : memref<304x128xf32, #tpu.memory_space<vmem>>, vector<16x18xf32>
    %c16 = arith.constant 16 : index
    %c0_1 = arith.constant 0 : index
    %1 = vector.load %arg1[%c16, %c0_1] : memref<304x128xf32, #tpu.memory_space<vmem>>, vector<32x48xf32>
    %c48 = arith.constant 48 : index
    %c0_2 = arith.constant 0 : index
    %2 = vector.load %arg1[%c48, %c0_2] : memref<304x128xf32, #tpu.memory_space<vmem>>, vector<48x96xf32>
    %c96 = arith.constant 96 : index
    %c0_3 = arith.constant 0 : index
    %3 = vector.load %arg1[%c96, %c0_3] : memref<304x128xf32, #tpu.memory_space<vmem>>, vector<48x48xf32>
    %c144 = arith.constant 144 : index
    %c0_4 = arith.constant 0 : index
    %4 = vector.load %arg1[%c144, %c0_4] : memref<304x128xf32, #tpu.memory_space<vmem>>, vector<5x48xf32>
    %c152 = arith.constant 152 : index
    %c0_5 = arith.constant 0 : index
    %5 = vector.load %arg1[%c152, %c0_5] : memref<304x128xf32, #tpu.memory_space<vmem>>, vector<16x1xf32>
    %c168 = arith.constant 168 : index
    %c0_6 = arith.constant 0 : index
    %6 = vector.load %arg1[%c168, %c0_6] : memref<304x128xf32, #tpu.memory_space<vmem>>, vector<32x1xf32>
    %c200 = arith.constant 200 : index
    %c0_7 = arith.constant 0 : index
    %7 = vector.load %arg1[%c200, %c0_7] : memref<304x128xf32, #tpu.memory_space<vmem>>, vector<48x1xf32>
    %c248 = arith.constant 248 : index
    %c0_8 = arith.constant 0 : index
    %8 = vector.load %arg1[%c248, %c0_8] : memref<304x128xf32, #tpu.memory_space<vmem>>, vector<48x1xf32>
    %c296 = arith.constant 296 : index
    %c0_9 = arith.constant 0 : index
    %9 = vector.load %arg1[%c296, %c0_9] : memref<304x128xf32, #tpu.memory_space<vmem>>, vector<5x1xf32>
    %10 = tpu.iota {dimensions = array<i32: 0>} : vector<44x44xi32>
    %11 = tpu.iota {dimensions = array<i32: 1>} : vector<44x44xi32>
    %c1_i32 = arith.constant 1 : i32
    %12 = vector.broadcast %c1_i32 : i32 to vector<44x44xi32>
    %13 = arith.subi %11, %12 : vector<44x44xi32>
    %14 = arith.cmpi eq, %10, %13 : vector<44x44xi32>
    %c1_i32_10 = arith.constant 1 : i32
    %15 = vector.broadcast %c1_i32_10 : i32 to vector<44x44xi32>
    %16 = arith.addi %11, %15 : vector<44x44xi32>
    %17 = arith.cmpi eq, %10, %16 : vector<44x44xi32>
    %c22_i32 = arith.constant 22 : i32
    %18 = vector.broadcast %c22_i32 : i32 to vector<44x44xi32>
    %19 = arith.cmpi ne, %11, %18 : vector<44x44xi32>
    %20 = arith.andi %14, %19 : vector<44x44xi1>
    %c21_i32 = arith.constant 21 : i32
    %21 = vector.broadcast %c21_i32 : i32 to vector<44x44xi32>
    %22 = arith.cmpi ne, %11, %21 : vector<44x44xi32>
    %23 = arith.andi %17, %22 : vector<44x44xi1>
    %cst = arith.constant 1.000000e+00 : f32
    %cst_11 = arith.constant 0.000000e+00 : f32
    %24 = vector.broadcast %cst : f32 to vector<44x44xf32>
    %25 = vector.broadcast %cst_11 : f32 to vector<44x44xf32>
    %26 = arith.select %20, %24, %25 : vector<44x44xi1>, vector<44x44xf32>
    %cst_12 = arith.constant 1.000000e+00 : f32
    %cst_13 = arith.constant 0.000000e+00 : f32
    %27 = vector.broadcast %cst_12 : f32 to vector<44x44xf32>
    %28 = vector.broadcast %cst_13 : f32 to vector<44x44xf32>
    %29 = arith.select %23, %27, %28 : vector<44x44xi1>, vector<44x44xf32>
    %c0_14 = arith.constant 0 : index
    %c0_15 = arith.constant 0 : index
    %30 = vector.load %arg0[%c0_14, %c0_15] : memref<18x44xf32, #tpu.memory_space<vmem>>, vector<18x44xf32>
    %cst_16 = arith.constant dense<0.000000e+00> : vector<16x44xf32>
    %31 = tpu.matmul %0, %30, %cst_16 {dimension_numbers = #tpu.dot_dimension_numbers<[1], [0], [0], [1], [0, 0, 1, 1], [], []>} : vector<16x18xf32>, vector<18x44xf32>, vector<16x44xf32> -> vector<16x44xf32>
    %32 = vector.broadcast %5 : vector<16x1xf32> to vector<16x44xf32>
    %33 = arith.addf %31, %32 : vector<16x44xf32>
    %cst_17 = arith.constant 0.000000e+00 : f32
    %34 = vector.broadcast %cst_17 : f32 to vector<16x44xf32>
    %35 = arith.maximumf %33, %34 : vector<16x44xf32>
    %cst_18 = arith.constant dense<0.000000e+00> : vector<16x44xf32>
    %36 = tpu.matmul %35, %26, %cst_18 {dimension_numbers = #tpu.dot_dimension_numbers<[1], [0], [0], [1], [0, 0, 1, 1], [], []>} : vector<16x44xf32>, vector<44x44xf32>, vector<16x44xf32> -> vector<16x44xf32>
    %cst_19 = arith.constant dense<0.000000e+00> : vector<16x44xf32>
    %37 = tpu.matmul %35, %29, %cst_19 {dimension_numbers = #tpu.dot_dimension_numbers<[1], [0], [0], [1], [0, 0, 1, 1], [], []>} : vector<16x44xf32>, vector<44x44xf32>, vector<16x44xf32> -> vector<16x44xf32>
    %c0_20 = arith.constant 0 : index
    %c0_21 = arith.constant 0 : index
    %38 = vector.load %arg3[%c0_20, %c0_21] : memref<48x44xf32, #tpu.memory_space<vmem>>, vector<16x44xf32>
    tpu.vector_store %arg3[%c0_20, %c0_21], %36 {strides = array<i32>} : memref<48x44xf32, #tpu.memory_space<vmem>>, vector<16x44xf32>,
    %c16_22 = arith.constant 16 : index
    %c0_23 = arith.constant 0 : index
    %39 = vector.load %arg3[%c16_22, %c0_23] : memref<48x44xf32, #tpu.memory_space<vmem>>, vector<16x44xf32>
    tpu.vector_store %arg3[%c16_22, %c0_23], %35 {strides = array<i32>} : memref<48x44xf32, #tpu.memory_space<vmem>>, vector<16x44xf32>,
    %c32 = arith.constant 32 : index
    %c0_24 = arith.constant 0 : index
    %40 = vector.load %arg3[%c32, %c0_24] : memref<48x44xf32, #tpu.memory_space<vmem>>, vector<16x44xf32>
    tpu.vector_store %arg3[%c32, %c0_24], %37 {strides = array<i32>} : memref<48x44xf32, #tpu.memory_space<vmem>>, vector<16x44xf32>,
    %c0_25 = arith.constant 0 : index
    %c0_26 = arith.constant 0 : index
    %41 = vector.load %arg3[%c0_25, %c0_26] : memref<48x44xf32, #tpu.memory_space<vmem>>, vector<48x44xf32>
    %cst_27 = arith.constant dense<0.000000e+00> : vector<32x44xf32>
    %42 = tpu.matmul %1, %41, %cst_27 {dimension_numbers = #tpu.dot_dimension_numbers<[1], [0], [0], [1], [0, 0, 1, 1], [], []>} : vector<32x48xf32>, vector<48x44xf32>, vector<32x44xf32> -> vector<32x44xf32>
    %43 = vector.broadcast %6 : vector<32x1xf32> to vector<32x44xf32>
    %44 = arith.addf %42, %43 : vector<32x44xf32>
    %cst_28 = arith.constant dense<0.000000e+00> : vector<32xf32>
    %45 = vector.multi_reduction <add>, %44, %cst_28 [1] : vector<32x44xf32> to vector<32xf32>
    %46 = vector.shape_cast %45 : vector<32xf32> to vector<32x1xf32>
    %cst_29 = arith.constant 4.400000e+01 : f32
    %47 = vector.broadcast %cst_29 : f32 to vector<32x1xf32>
    %48 = arith.divf %46, %47 : vector<32x1xf32>
    %49 = arith.mulf %44, %44 : vector<32x44xf32>
    %cst_30 = arith.constant dense<0.000000e+00> : vector<32xf32>
    %50 = vector.multi_reduction <add>, %49, %cst_30 [1] : vector<32x44xf32> to vector<32xf32>
    %51 = vector.shape_cast %50 : vector<32xf32> to vector<32x1xf32>
    %cst_31 = arith.constant 4.400000e+01 : f32
    %52 = vector.broadcast %cst_31 : f32 to vector<32x1xf32>
    %53 = arith.divf %51, %52 : vector<32x1xf32>
    %54 = arith.mulf %48, %48 : vector<32x1xf32>
    %55 = arith.subf %53, %54 : vector<32x1xf32>
    %56 = vector.broadcast %48 : vector<32x1xf32> to vector<32x44xf32>
    %57 = arith.subf %44, %56 : vector<32x44xf32>
    %cst_32 = arith.constant 9.99999974E-6 : f32
    %58 = vector.broadcast %cst_32 : f32 to vector<32x1xf32>
    %59 = arith.addf %55, %58 : vector<32x1xf32>
    %60 = math.rsqrt %59 : vector<32x1xf32>
    %61 = vector.broadcast %60 : vector<32x1xf32> to vector<32x44xf32>
    %62 = arith.mulf %57, %61 : vector<32x44xf32>
    %cst_33 = arith.constant dense<0.000000e+00> : vector<32x44xf32>
    %63 = tpu.matmul %62, %26, %cst_33 {dimension_numbers = #tpu.dot_dimension_numbers<[1], [0], [0], [1], [0, 0, 1, 1], [], []>} : vector<32x44xf32>, vector<44x44xf32>, vector<32x44xf32> -> vector<32x44xf32>
    %cst_34 = arith.constant dense<0.000000e+00> : vector<32x44xf32>
    %64 = tpu.matmul %62, %29, %cst_34 {dimension_numbers = #tpu.dot_dimension_numbers<[1], [0], [0], [1], [0, 0, 1, 1], [], []>} : vector<32x44xf32>, vector<44x44xf32>, vector<32x44xf32> -> vector<32x44xf32>
    %c0_35 = arith.constant 0 : index
    %c0_36 = arith.constant 0 : index
    %65 = vector.load %arg4[%c0_35, %c0_36] : memref<96x44xf32, #tpu.memory_space<vmem>>, vector<32x44xf32>
    tpu.vector_store %arg4[%c0_35, %c0_36], %63 {strides = array<i32>} : memref<96x44xf32, #tpu.memory_space<vmem>>, vector<32x44xf32>,
    %c32_37 = arith.constant 32 : index
    %c0_38 = arith.constant 0 : index
    %66 = vector.load %arg4[%c32_37, %c0_38] : memref<96x44xf32, #tpu.memory_space<vmem>>, vector<32x44xf32>
    tpu.vector_store %arg4[%c32_37, %c0_38], %62 {strides = array<i32>} : memref<96x44xf32, #tpu.memory_space<vmem>>, vector<32x44xf32>,
    %c64 = arith.constant 64 : index
    %c0_39 = arith.constant 0 : index
    %67 = vector.load %arg4[%c64, %c0_39] : memref<96x44xf32, #tpu.memory_space<vmem>>, vector<32x44xf32>
    tpu.vector_store %arg4[%c64, %c0_39], %64 {strides = array<i32>} : memref<96x44xf32, #tpu.memory_space<vmem>>, vector<32x44xf32>,
    %c0_40 = arith.constant 0 : index
    %c0_41 = arith.constant 0 : index
    %68 = vector.load %arg4[%c0_40, %c0_41] : memref<96x44xf32, #tpu.memory_space<vmem>>, vector<96x44xf32>
    %cst_42 = arith.constant dense<0.000000e+00> : vector<48x44xf32>
    %69 = tpu.matmul %2, %68, %cst_42 {dimension_numbers = #tpu.dot_dimension_numbers<[1], [0], [0], [1], [0, 0, 1, 1], [], []>} : vector<48x96xf32>, vector<96x44xf32>, vector<48x44xf32> -> vector<48x44xf32>
    %70 = vector.broadcast %7 : vector<48x1xf32> to vector<48x44xf32>
    %71 = arith.addf %69, %70 : vector<48x44xf32>
    %cst_43 = arith.constant dense<0.000000e+00> : vector<48xf32>
    %72 = vector.multi_reduction <add>, %71, %cst_43 [1] : vector<48x44xf32> to vector<48xf32>
    %73 = vector.shape_cast %72 : vector<48xf32> to vector<48x1xf32>
    %cst_44 = arith.constant 4.400000e+01 : f32
    %74 = vector.broadcast %cst_44 : f32 to vector<48x1xf32>
    %75 = arith.divf %73, %74 : vector<48x1xf32>
    %76 = arith.mulf %71, %71 : vector<48x44xf32>
    %cst_45 = arith.constant dense<0.000000e+00> : vector<48xf32>
    %77 = vector.multi_reduction <add>, %76, %cst_45 [1] : vector<48x44xf32> to vector<48xf32>
    %78 = vector.shape_cast %77 : vector<48xf32> to vector<48x1xf32>
    %cst_46 = arith.constant 4.400000e+01 : f32
    %79 = vector.broadcast %cst_46 : f32 to vector<48x1xf32>
    %80 = arith.divf %78, %79 : vector<48x1xf32>
    %81 = arith.mulf %75, %75 : vector<48x1xf32>
    %82 = arith.subf %80, %81 : vector<48x1xf32>
    %83 = vector.broadcast %75 : vector<48x1xf32> to vector<48x44xf32>
    %84 = arith.subf %71, %83 : vector<48x44xf32>
    %cst_47 = arith.constant 9.99999974E-6 : f32
    %85 = vector.broadcast %cst_47 : f32 to vector<48x1xf32>
    %86 = arith.addf %82, %85 : vector<48x1xf32>
    %87 = math.rsqrt %86 : vector<48x1xf32>
    %88 = vector.broadcast %87 : vector<48x1xf32> to vector<48x44xf32>
    %89 = arith.mulf %84, %88 : vector<48x44xf32>
    %90 = tpu.iota {dimensions = array<i32: 0>} : vector<44x2xi32>
    %91 = tpu.iota {dimensions = array<i32: 1>} : vector<44x2xi32>
    %c22_i32_48 = arith.constant 22 : i32
    %92 = vector.broadcast %c22_i32_48 : i32 to vector<44x2xi32>
    %93 = arith.muli %91, %92 : vector<44x2xi32>
    %94 = arith.cmpi sge, %90, %93 : vector<44x2xi32>
    %c1_i32_49 = arith.constant 1 : i32
    %95 = vector.broadcast %c1_i32_49 : i32 to vector<44x2xi32>
    %96 = arith.addi %91, %95 : vector<44x2xi32>
    %c22_i32_50 = arith.constant 22 : i32
    %97 = vector.broadcast %c22_i32_50 : i32 to vector<44x2xi32>
    %98 = arith.muli %96, %97 : vector<44x2xi32>
    %99 = arith.cmpi slt, %90, %98 : vector<44x2xi32>
    %100 = arith.andi %94, %99 : vector<44x2xi1>
    %cst_51 = arith.constant 1.000000e+00 : f32
    %cst_52 = arith.constant 0.000000e+00 : f32
    %101 = vector.broadcast %cst_51 : f32 to vector<44x2xf32>
    %102 = vector.broadcast %cst_52 : f32 to vector<44x2xf32>
    %103 = arith.select %100, %101, %102 : vector<44x2xi1>, vector<44x2xf32>
    %cst_53 = arith.constant dense<0.000000e+00> : vector<48x2xf32>
    %104 = tpu.matmul %89, %103, %cst_53 {dimension_numbers = #tpu.dot_dimension_numbers<[1], [0], [0], [1], [0, 0, 1, 1], [], []>} : vector<48x44xf32>, vector<44x2xf32>, vector<48x2xf32> -> vector<48x2xf32>
    %cst_54 = arith.constant 0.0454545468 : f32
    %105 = vector.broadcast %cst_54 : f32 to vector<48x2xf32>
    %106 = arith.mulf %104, %105 : vector<48x2xf32>
    %cst_55 = arith.constant dense<0.000000e+00> : vector<48x2xf32>
    %107 = tpu.matmul %3, %106, %cst_55 {dimension_numbers = #tpu.dot_dimension_numbers<[1], [0], [0], [1], [0, 0, 1, 1], [], []>} : vector<48x48xf32>, vector<48x2xf32>, vector<48x2xf32> -> vector<48x2xf32>
    %108 = vector.broadcast %8 : vector<48x1xf32> to vector<48x2xf32>
    %109 = arith.addf %107, %108 : vector<48x2xf32>
    %cst_56 = arith.constant dense<0.000000e+00> : vector<5x2xf32>
    %110 = tpu.matmul %4, %109, %cst_56 {dimension_numbers = #tpu.dot_dimension_numbers<[1], [0], [0], [1], [0, 0, 1, 1], [], []>} : vector<5x48xf32>, vector<48x2xf32>, vector<5x2xf32> -> vector<5x2xf32>
    %111 = vector.broadcast %9 : vector<5x1xf32> to vector<5x2xf32>
    %112 = arith.addf %110, %111 : vector<5x2xf32>
    %c0_57 = arith.constant 0 : index
    %c0_58 = arith.constant 0 : index
    %113 = vector.load %arg2[%c0_57, %c0_58] : memref<5x2xf32, #tpu.memory_space<vmem>>, vector<5x2xf32>
    tpu.vector_store %arg2[%c0_57, %c0_58], %112 {strides = array<i32>} : memref<5x2xf32, #tpu.memory_space<vmem>>, vector<5x2xf32>,
    return
  }
}

</mosaic_0001>

<llo_original>
// kernel: pers_model_forward.1
$region0: #{pers_model_forward.1}
  #allocation0 [shape = 'u32[]', space=smem, size = 0x4, offset = 0x4, fixed_abs, tag = 'smem constant byte address 0x4 - core index']
  #allocation1 [shape = 'u32[144,128]{1,0:T(1,128)}', space=vmem, size = 0x12000, scoped, tag = 'internal scratch']
  #allocation2 [shape = 'f32[48,44]{1,0:T(8,128)}', space=vmem, size = 0x6000, scoped, tag = 'scratch operand']
  #allocation3 [shape = 'f32[96,44]{1,0:T(8,128)}', space=vmem, size = 0xc000, scoped, tag = 'scratch operand']
  %s0 = inlined_call_operand.vmem [shape: f32[18,44], index: 0, kind: input, shape index: {}]
  %s1 = inlined_call_operand.vmem [shape: f32[304,128], index: 1, kind: input, shape index: {}]
  %s2 = inlined_call_operand.vmem [shape: f32[5,2], index: 2, kind: output, shape index: {}]
  %s3 = sld [smem:[#allocation0]]
  $region18: #{pers_model_forward.1} parent=0
    _
  %s5 = ssub.s32 1, %s3
  %s6 = scalar_select 0, %s5, %s3
  // Predicated region
  $region2: #{pers_model_forward.1} parent=0 // pred_check
    _
  $region3: #{pers_model_forward.1} parent=0 // pred_check_branch
    %8 = sbr.rel (0) target = $region5
  $region4: #{pers_model_forward.1} parent=0 // pred_region
    _
  $region5: #{pers_model_forward.1} parent=0 // pred_fallthru
    _
  // Predicated region
  $region6: #{pers_model_forward.1} parent=0 // pred_check
    _
  $region7: #{pers_model_forward.1} parent=0 // pred_check_branch
    %10 = sbr.rel (0) target = $region9
  $region8: #{pers_model_forward.1} parent=0 // pred_region
    _
  $region9: #{pers_model_forward.1} parent=0 // pred_fallthru
    _
  %v11 = vld [vmem:[%s1] sm:$0xff]
  %v12 = vld [vmem:[%s1 + $0x8] sm:$0xff]
  %v13 = vld [vmem:[%s1 + $0x10] sm:$0xff]
  %v14 = vld [vmem:[%s1 + $0x18] sm:$0xff]
  %v15 = vld [vmem:[%s1 + $0x20] sm:$0xff]
  %v16 = vld [vmem:[%s1 + $0x28] sm:$0xff]
  %v17 = vld [vmem:[%s1 + $0x30] sm:$0xff]
  %v18 = vld [vmem:[%s1 + $0x38] sm:$0xff]
  %v19 = vld [vmem:[%s1 + $0x40] sm:$0xff]
  %v20 = vld [vmem:[%s1 + $0x48] sm:$0xff]
  %v21 = vld [vmem:[%s1 + $0x50] sm:$0xff]
  %v22 = vld [vmem:[%s1 + $0x58] sm:$0xff]
  %v23 = vld [vmem:[%s1 + $0x60] sm:$0xff]
  %v24 = vld [vmem:[%s1 + $0x68] sm:$0xff]
  %v25 = vld [vmem:[%s1 + $0x70] sm:$0xff]
  %v26 = vld [vmem:[%s1 + $0x78] sm:$0xff]
  %v27 = vld [vmem:[%s1 + $0x80] sm:$0xff]
  %v28 = vld [vmem:[%s1 + $0x88] sm:$0xff]
  %v29 = vld [vmem:[%s1 + $0x90] sm:$0x1f]
  %v30 = vld [vmem:[%s1 + $0x98] sm:$0xff]
  %v31 = vld [vmem:[%s1 + $0xa0] sm:$0xff]
  %v32 = vld [vmem:[%s1 + $0xa8] sm:$0xff]
  %v33 = vld [vmem:[%s1 + $0xb0] sm:$0xff]
  %v34 = vld [vmem:[%s1 + $0xb8] sm:$0xff]
  %v35 = vld [vmem:[%s1 + $0xc0] sm:$0xff]
  %v36 = vld [vmem:[%s1 + $0xc8] sm:$0xff]
  %v37 = vld [vmem:[%s1 + $0xd0] sm:$0xff]
  %v38 = vld [vmem:[%s1 + $0xd8] sm:$0xff]
  %v39 = vld [vmem:[%s1 + $0xe0] sm:$0xff]
  %v40 = vld [vmem:[%s1 + $0xe8] sm:$0xff]
  %v41 = vld [vmem:[%s1 + $0xf0] sm:$0xff]
  %v42 = vld [vmem:[%s1 + $0xf8] sm:$0xff]
  %v43 = vld [vmem:[%s1 + $0x100] sm:$0xff]
  %v44 = vld [vmem:[%s1 + $0x108] sm:$0xff]
  %v45 = vld [vmem:[%s1 + $0x110] sm:$0xff]
  %v46 = vld [vmem:[%s1 + $0x118] sm:$0xff]
  %v47 = vld [vmem:[%s1 + $0x120] sm:$0xff]
  %v48 = vld [vmem:[%s1 + $0x128] sm:$0x1f]
  %v49 = vlaneseq
  %v50 = vshrl.u32 %v49, 7
  %v51 = vadd.s32 %v50, 8
  %v52 = vadd.s32 %v50, 16
  %v53 = vadd.s32 %v50, 24
  %v54 = vadd.s32 %v50, 32
  %v55 = vadd.s32 %v50, 40
  %v56 = vlaneseq
  %v57 = vand.u32 %v56, 127
  %v58 = vsub.s32 %v57, 1
  %vm59 = vcmp.eq.s32.totalorder %v50, %v58
  %vm60 = vcmp.eq.s32.totalorder %v51, %v58
  %vm61 = vcmp.eq.s32.totalorder %v52, %v58
  %vm62 = vcmp.eq.s32.totalorder %v53, %v58
  %vm63 = vcmp.eq.s32.totalorder %v54, %v58
  %vm64 = vcmp.eq.s32.totalorder %v55, %v58
  %v65 = vadd.s32 %v57, 1
  %vm66 = vcmp.eq.s32.totalorder %v50, %v65
  %vm67 = vcmp.eq.s32.totalorder %v51, %v65
  %vm68 = vcmp.eq.s32.totalorder %v52, %v65
  %vm69 = vcmp.eq.s32.totalorder %v53, %v65
  %vm70 = vcmp.eq.s32.totalorder %v54, %v65
  %vm71 = vcmp.eq.s32.totalorder %v55, %v65
  %vm72 = vcmp.ne.s32.totalorder %v57, 22
  %vm73 = vmand %vm59, %vm72
  %vm74 = vmand %vm60, %vm72
  %vm75 = vmand %vm61, %vm72
  %vm76 = vmand %vm62, %vm72
  %vm77 = vmand %vm63, %vm72
  %vm78 = vmand %vm64, %vm72
  %vm79 = vcmp.ne.s32.totalorder %v57, 21
  %vm80 = vmand %vm66, %vm79
  %vm81 = vmand %vm67, %vm79
  %vm82 = vmand %vm68, %vm79
  %vm83 = vmand %vm69, %vm79
  %vm84 = vmand %vm70, %vm79
  %vm85 = vmand %vm71, %vm79
  %v86 = vsel %vm73, 1.0, 0.0
  %v87 = vsel %vm74, 1.0, 0.0
  %v88 = vsel %vm75, 1.0, 0.0
  %v89 = vsel %vm76, 1.0, 0.0
  %v90 = vsel %vm77, 1.0, 0.0
  %v91 = vsel %vm78, 1.0, 0.0
  %v92 = vsel %vm80, 1.0, 0.0
  %v93 = vsel %vm81, 1.0, 0.0
  %v94 = vsel %vm82, 1.0, 0.0
  %v95 = vsel %vm83, 1.0, 0.0
  %v96 = vsel %vm84, 1.0, 0.0
  %v97 = vsel %vm85, 1.0, 0.0
  %v98 = vld [vmem:[%s0] sm:$0xff]
  %v99 = vld [vmem:[%s0 + $0x8] sm:$0xff]
  %v100 = vld [vmem:[%s0 + $0x10] sm:$0x3]
  %102 = vset.pattern.permute.xlu0 0
  %103 = vperm.xlu0 %102, %v30
  %v104 = vpop.permute.xlu0 %103
  %107 = vset.pattern.permute.xlu0 0
  %108 = vperm.xlu0 %107, %v31
  %v109 = vpop.permute.xlu0 %108
  %vm111 = vcmask 146432
  %v113 = vsel %vm111, %v11, 0
  %v116 = vsel %vm111, %v12, 0
  %vm118 = vcmask 1041408
  %v120 = vsel %vm118, %v100, 0
  %122 = vmatprep.subr.mxu0 0.0
  %123 = vmatpush1.msra.mxu0 %v98
  %124 = vmatprep.subr.mxu0 0.0
  %125 = vmatpush1.msra.mxu0 %v99
  %126 = vmatprep.subr.mxu0 0.0
  %127 = vmatpush1.msra.mxu0 %v120
  %128 = vmatprep.subr.mxu0 0.0
  %129 = vmatpush1.msra.mxu0 0.0
  %130 = vmatprep.subr.mxu0 0.0
  %131 = vmatpush1.msra.mxu0 0.0
  %132 = vmatprep.subr.mxu0 0.0
  %133 = vmatpush1.msra.mxu0 0.0
  %134 = vmatprep.subr.mxu0 0.0
  %135 = vmatpush1.msra.mxu0 0.0
  %136 = vmatprep.subr.mxu0 0.0
  %137 = vmatpush1.msra.mxu0 0.0
  %138 = vmatprep.subr.mxu0 0.0
  %139 = vmatpush1.msra.mxu0 0.0
  %140 = vmatprep.subr.mxu0 0.0
  %141 = vmatpush1.msra.mxu0 0.0
  %142 = vmatprep.subr.mxu0 0.0
  %143 = vmatpush1.msra.mxu0 0.0
  %144 = vmatprep.subr.mxu0 0.0
  %145 = vmatpush1.msra.mxu0 0.0
  %146 = vmatprep.subr.mxu0 0.0
  %147 = vmatpush1.msra.mxu0 0.0
  %148 = vmatprep.subr.mxu0 0.0
  %149 = vmatpush1.msra.mxu0 0.0
  %150 = vmatprep.subr.mxu0 0.0
  %151 = vmatpush1.msra.mxu0 0.0
  %152 = vmatprep.subr.mxu0 0.0
  %153 = vmatpush1.msra.mxu0 0.0
  %154 = vmatprep.subr.mxu0 0.0
  %155 = vmatpush1.msra.mxu0 0.0
  %156 = vmatprep.subr.mxu0 0.0
  %157 = vmatpush1.msra.mxu0 0.0
  %158 = vmatprep.subr.mxu0 0.0
  %159 = vmatpush1.msra.mxu0 0.0
  %160 = vmatprep.subr.mxu0 0.0
  %161 = vmatpush1.msra.mxu0 0.0
  %162 = vmatprep.subr.mxu0 0.0
  %163 = vmatpush1.msra.mxu0 0.0
  %164 = vmatprep.subr.mxu0 0.0
  %165 = vmatpush1.msra.mxu0 0.0
  %166 = vmatprep.subr.mxu0 0.0
  %167 = vmatpush1.msra.mxu0 0.0
  %168 = vmatprep.subr.mxu0 0.0
  %169 = vmatpush1.msra.mxu0 0.0
  %170 = vmatprep.subr.mxu0 0.0
  %171 = vmatpush1.msra.mxu0 0.0
  %172 = vmatprep.subr.mxu0 0.0
  %173 = vmatpush1.msra.mxu0 0.0
  %174 = vmatprep.subr.mxu0 0.0
  %175 = vmatpush1.msra.mxu0 0.0
  %176 = vmatprep.subr.mxu0 0.0
  %177 = vmatpush1.msra.mxu0 0.0
  %178 = vmatprep.subr.mxu0 0.0
  %179 = vmatpush1.msra.mxu0 0.0
  %180 = vmatprep.subr.mxu0 0.0
  %181 = vmatpush1.msra.mxu0 0.0
  %182 = vmatprep.subr.mxu0 0.0
  %183 = vmatpush1.msra.mxu0 0.0
  %184 = vmatprep.subr.mxu0 0.0
  %185 = vmatpush1.msra.mxu0 0.0
  %186 = vmatprep.mubr.f32.mxu0 0.0
  %187 = vmatmul.mubr.f32.gmra.mrb[0].mxu0 %v113
  %v188 = vpop.f32.mrb[0].mxu0
  %v189 = vadd.f32 %v104, %v188
  %v190 = vpop.f32.mrb[0].mxu0
  %191 = vmatprep.mubr.f32.mxu0 0.0
  %192 = vmatmul.mubr.f32.gmra.mrb[0].mxu0 %v116
  %v193 = vpop.f32.mrb[0].mxu0
  %v194 = vadd.f32 %v109, %v193
  %v195 = vpop.f32.mrb[0].mxu0
  %196 = vdwg.mxu0
  %v197 = vmax.f32 %v189, 0.0
  %v198 = vmax.f32 %v194, 0.0
  %vm199 = vcmask 359424
  %v201 = vsel %vm199, %v197, 0
  %v204 = vsel %vm199, %v198, 0
  %vm206 = vcmask 1043456
  %v208 = vsel %vm206, %v91, 0
  %210 = vmatprep.subr.mxu0 0.0
  %211 = vmatpush1.msra.mxu0 %v86
  %212 = vmatprep.subr.mxu0 0.0
  %213 = vmatpush1.msra.mxu0 %v87
  %214 = vmatprep.subr.mxu0 0.0
  %215 = vmatpush1.msra.mxu0 %v88
  %216 = vmatprep.subr.mxu0 0.0
  %217 = vmatpush1.msra.mxu0 %v89
  %218 = vmatprep.subr.mxu0 0.0
  %219 = vmatpush1.msra.mxu0 %v90
  %220 = vmatprep.subr.mxu0 0.0
  %221 = vmatpush1.msra.mxu0 %v208
  %222 = vmatprep.subr.mxu0 0.0
  %223 = vmatpush1.msra.mxu0 0.0
  %224 = vmatprep.subr.mxu0 0.0
  %225 = vmatpush1.msra.mxu0 0.0
  %226 = vmatprep.subr.mxu0 0.0
  %227 = vmatpush1.msra.mxu0 0.0
  %228 = vmatprep.subr.mxu0 0.0
  %229 = vmatpush1.msra.mxu0 0.0
  %230 = vmatprep.subr.mxu0 0.0
  %231 = vmatpush1.msra.mxu0 0.0
  %232 = vmatprep.subr.mxu0 0.0
  %233 = vmatpush1.msra.mxu0 0.0
  %234 = vmatprep.subr.mxu0 0.0
  %235 = vmatpush1.msra.mxu0 0.0
  %236 = vmatprep.subr.mxu0 0.0
  %237 = vmatpush1.msra.mxu0 0.0
  %238 = vmatprep.subr.mxu0 0.0
  %239 = vmatpush1.msra.mxu0 0.0
  %240 = vmatprep.subr.mxu0 0.0
  %241 = vmatpush1.msra.mxu0 0.0
  %242 = vmatprep.subr.mxu0 0.0
  %243 = vmatpush1.msra.mxu0 0.0
  %244 = vmatprep.subr.mxu0 0.0
  %245 = vmatpush1.msra.mxu0 0.0
  %246 = vmatprep.subr.mxu0 0.0
  %247 = vmatpush1.msra.mxu0 0.0
  %248 = vmatprep.subr.mxu0 0.0
  %249 = vmatpush1.msra.mxu0 0.0
  %250 = vmatprep.subr.mxu0 0.0
  %251 = vmatpush1.msra.mxu0 0.0
  %252 = vmatprep.subr.mxu0 0.0
  %253 = vmatpush1.msra.mxu0 0.0
  %254 = vmatprep.subr.mxu0 0.0
  %255 = vmatpush1.msra.mxu0 0.0
  %256 = vmatprep.subr.mxu0 0.0
  %257 = vmatpush1.msra.mxu0 0.0
  %258 = vmatprep.subr.mxu0 0.0
  %259 = vmatpush1.msra.mxu0 0.0
  %260 = vmatprep.subr.mxu0 0.0
  %261 = vmatpush1.msra.mxu0 0.0
  %262 = vmatprep.subr.mxu0 0.0
  %263 = vmatpush1.msra.mxu0 0.0
  %264 = vmatprep.subr.mxu0 0.0
  %265 = vmatpush1.msra.mxu0 0.0
  %266 = vmatprep.subr.mxu0 0.0
  %267 = vmatpush1.msra.mxu0 0.0
  %268 = vmatprep.subr.mxu0 0.0
  %269 = vmatpush1.msra.mxu0 0.0
  %270 = vmatprep.subr.mxu0 0.0
  %271 = vmatpush1.msra.mxu0 0.0
  %272 = vmatprep.subr.mxu0 0.0
  %273 = vmatpush1.msra.mxu0 0.0
  %274 = vmatprep.mubr.f32.mxu0 0.0
  %275 = vmatmul.mubr.f32.gmra.mrb[0].mxu0 %v201
  %v276 = vpop.f32.mrb[0].mxu0
  %v277 = vadd.f32 0.0, %v276
  %v278 = vpop.f32.mrb[0].mxu0
  %279 = vmatprep.mubr.f32.mxu0 0.0
  %280 = vmatmul.mubr.f32.gmra.mrb[0].mxu0 %v204
  %v281 = vpop.f32.mrb[0].mxu0
  %v282 = vadd.f32 0.0, %v281
  %v283 = vpop.f32.mrb[0].mxu0
  %284 = vdwg.mxu0
  %v286 = vsel %vm206, %v97, 0
  %288 = vmatprep.subr.mxu0 0.0
  %289 = vmatpush1.msra.mxu0 %v92
  %290 = vmatprep.subr.mxu0 0.0
  %291 = vmatpush1.msra.mxu0 %v93
  %292 = vmatprep.subr.mxu0 0.0
  %293 = vmatpush1.msra.mxu0 %v94
  %294 = vmatprep.subr.mxu0 0.0
  %295 = vmatpush1.msra.mxu0 %v95
  %296 = vmatprep.subr.mxu0 0.0
  %297 = vmatpush1.msra.mxu0 %v96
  %298 = vmatprep.subr.mxu0 0.0
  %299 = vmatpush1.msra.mxu0 %v286
  %300 = vmatprep.subr.mxu0 0.0
  %301 = vmatpush1.msra.mxu0 0.0
  %302 = vmatprep.subr.mxu0 0.0
  %303 = vmatpush1.msra.mxu0 0.0
  %304 = vmatprep.subr.mxu0 0.0
  %305 = vmatpush1.msra.mxu0 0.0
  %306 = vmatprep.subr.mxu0 0.0
  %307 = vmatpush1.msra.mxu0 0.0
  %308 = vmatprep.subr.mxu0 0.0
  %309 = vmatpush1.msra.mxu0 0.0
  %310 = vmatprep.subr.mxu0 0.0
  %311 = vmatpush1.msra.mxu0 0.0
  %312 = vmatprep.subr.mxu0 0.0
  %313 = vmatpush1.msra.mxu0 0.0
  %314 = vmatprep.subr.mxu0 0.0
  %315 = vmatpush1.msra.mxu0 0.0
  %316 = vmatprep.subr.mxu0 0.0
  %317 = vmatpush1.msra.mxu0 0.0
  %318 = vmatprep.subr.mxu0 0.0
  %319 = vmatpush1.msra.mxu0 0.0
  %320 = vmatprep.subr.mxu0 0.0
  %321 = vmatpush1.msra.mxu0 0.0
  %322 = vmatprep.subr.mxu0 0.0
  %323 = vmatpush1.msra.mxu0 0.0
  %324 = vmatprep.subr.mxu0 0.0
  %325 = vmatpush1.msra.mxu0 0.0
  %326 = vmatprep.subr.mxu0 0.0
  %327 = vmatpush1.msra.mxu0 0.0
  %328 = vmatprep.subr.mxu0 0.0
  %329 = vmatpush1.msra.mxu0 0.0
  %330 = vmatprep.subr.mxu0 0.0
  %331 = vmatpush1.msra.mxu0 0.0
  %332 = vmatprep.subr.mxu0 0.0
  %333 = vmatpush1.msra.mxu0 0.0
  %334 = vmatprep.subr.mxu0 0.0
  %335 = vmatpush1.msra.mxu0 0.0
  %336 = vmatprep.subr.mxu0 0.0
  %337 = vmatpush1.msra.mxu0 0.0
  %338 = vmatprep.subr.mxu0 0.0
  %339 = vmatpush1.msra.mxu0 0.0
  %340 = vmatprep.subr.mxu0 0.0
  %341 = vmatpush1.msra.mxu0 0.0
  %342 = vmatprep.subr.mxu0 0.0
  %343 = vmatpush1.msra.mxu0 0.0
  %344 = vmatprep.subr.mxu0 0.0
  %345 = vmatpush1.msra.mxu0 0.0
  %346 = vmatprep.subr.mxu0 0.0
  %347 = vmatpush1.msra.mxu0 0.0
  %348 = vmatprep.subr.mxu0 0.0
  %349 = vmatpush1.msra.mxu0 0.0
  %350 = vmatprep.subr.mxu0 0.0
  %351 = vmatpush1.msra.mxu0 0.0
  %352 = vmatprep.mubr.f32.mxu0 0.0
  %353 = vmatmul.mubr.f32.gmra.mrb[0].mxu0 %v201
  %v354 = vpop.f32.mrb[0].mxu0
  %v355 = vadd.f32 0.0, %v354
  %v356 = vpop.f32.mrb[0].mxu0
  %357 = vmatprep.mubr.f32.mxu0 0.0
  %358 = vmatmul.mubr.f32.gmra.mrb[0].mxu0 %v204
  %v359 = vpop.f32.mrb[0].mxu0
  %v360 = vadd.f32 0.0, %v359
  %v361 = vpop.f32.mrb[0].mxu0
  %362 = vdwg.mxu0
  %363 = vst.msk [vmem:[#allocation2] sm:$0xff] %vm199, %v277
  %364 = vst.msk [vmem:[#allocation2 + $0x8] sm:$0xff] %vm199, %v282
  %365 = vst.msk [vmem:[#allocation2 + $0x10] sm:$0xff] %vm199, %v197
  %366 = vst.msk [vmem:[#allocation2 + $0x18] sm:$0xff] %vm199, %v198
  %367 = vst.msk [vmem:[#allocation2 + $0x20] sm:$0xff] %vm199, %v355
  %368 = vst.msk [vmem:[#allocation2 + $0x28] sm:$0xff] %vm199, %v360
  %v369 = vld [vmem:[#allocation2] sm:$0xff]
  %v370 = vld [vmem:[#allocation2 + $0x8] sm:$0xff]
  %v371 = vld [vmem:[#allocation2 + $0x10] sm:$0xff]
  %v372 = vld [vmem:[#allocation2 + $0x18] sm:$0xff]
  %v373 = vld [vmem:[#allocation2 + $0x20] sm:$0xff]
  %v374 = vld [vmem:[#allocation2 + $0x28] sm:$0xff]
  %376 = vset.pattern.permute.xlu0 0
  %377 = vperm.xlu0 %376, %v32
  %v378 = vpop.permute.xlu0 %377
  %381 = vset.pattern.permute.xlu0 0
  %382 = vperm.xlu0 %381, %v33
  %v383 = vpop.permute.xlu0 %382
  %386 = vset.pattern.permute.xlu0 0
  %387 = vperm.xlu0 %386, %v34
  %v388 = vpop.permute.xlu0 %387
  %391 = vset.pattern.permute.xlu0 0
  %392 = vperm.xlu0 %391, %v35
  %v393 = vpop.permute.xlu0 %392
  %vm395 = vcmask 392192
  %v397 = vsel %vm395, %v13, 0
  %v400 = vsel %vm395, %v14, 0
  %v403 = vsel %vm395, %v15, 0
  %v406 = vsel %vm395, %v16, 0
  %408 = vmatprep.subr.mxu0 0.0
  %409 = vmatpush1.msra.mxu0 %v369
  %410 = vmatprep.subr.mxu0 0.0
  %411 = vmatpush1.msra.mxu0 %v370
  %412 = vmatprep.subr.mxu0 0.0
  %413 = vmatpush1.msra.mxu0 %v371
  %414 = vmatprep.subr.mxu0 0.0
  %415 = vmatpush1.msra.mxu0 %v372
  %416 = vmatprep.subr.mxu0 0.0
  %417 = vmatpush1.msra.mxu0 %v373
  %418 = vmatprep.subr.mxu0 0.0
  %419 = vmatpush1.msra.mxu0 %v374
  %420 = vmatprep.subr.mxu0 0.0
  %421 = vmatpush1.msra.mxu0 0.0
  %422 = vmatprep.subr.mxu0 0.0
  %423 = vmatpush1.msra.mxu0 0.0
  %424 = vmatprep.subr.mxu0 0.0
  %425 = vmatpush1.msra.mxu0 0.0
  %426 = vmatprep.subr.mxu0 0.0
  %427 = vmatpush1.msra.mxu0 0.0
  %428 = vmatprep.subr.mxu0 0.0
  %429 = vmatpush1.msra.mxu0 0.0
  %430 = vmatprep.subr.mxu0 0.0
  %431 = vmatpush1.msra.mxu0 0.0
  %432 = vmatprep.subr.mxu0 0.0
  %433 = vmatpush1.msra.mxu0 0.0
  %434 = vmatprep.subr.mxu0 0.0
  %435 = vmatpush1.msra.mxu0 0.0
  %436 = vmatprep.subr.mxu0 0.0
  %437 = vmatpush1.msra.mxu0 0.0
  %438 = vmatprep.subr.mxu0 0.0
  %439 = vmatpush1.msra.mxu0 0.0
  %440 = vmatprep.subr.mxu0 0.0
  %441 = vmatpush1.msra.mxu0 0.0
  %442 = vmatprep.subr.mxu0 0.0
  %443 = vmatpush1.msra.mxu0 0.0
  %444 = vmatprep.subr.mxu0 0.0
  %445 = vmatpush1.msra.mxu0 0.0
  %446 = vmatprep.subr.mxu0 0.0
  %447 = vmatpush1.msra.mxu0 0.0
  %448 = vmatprep.subr.mxu0 0.0
  %449 = vmatpush1.msra.mxu0 0.0
  %450 = vmatprep.subr.mxu0 0.0
  %451 = vmatpush1.msra.mxu0 0.0
  %452 = vmatprep.subr.mxu0 0.0
  %453 = vmatpush1.msra.mxu0 0.0
  %454 = vmatprep.subr.mxu0 0.0
  %455 = vmatpush1.msra.mxu0 0.0
  %456 = vmatprep.subr.mxu0 0.0
  %457 = vmatpush1.msra.mxu0 0.0
  %458 = vmatprep.subr.mxu0 0.0
  %459 = vmatpush1.msra.mxu0 0.0
  %460 = vmatprep.subr.mxu0 0.0
  %461 = vmatpush1.msra.mxu0 0.0
  %462 = vmatprep.subr.mxu0 0.0
  %463 = vmatpush1.msra.mxu0 0.0
  %464 = vmatprep.subr.mxu0 0.0
  %465 = vmatpush1.msra.mxu0 0.0
  %466 = vmatprep.subr.mxu0 0.0
  %467 = vmatpush1.msra.mxu0 0.0
  %468 = vmatprep.subr.mxu0 0.0
  %469 = vmatpush1.msra.mxu0 0.0
  %470 = vmatprep.subr.mxu0 0.0
  %471 = vmatpush1.msra.mxu0 0.0
  %472 = vmatprep.mubr.f32.mxu0 0.0
  %473 = vmatmul.mubr.f32.gmra.mrb[0].mxu0 %v397
  %v474 = vpop.f32.mrb[0].mxu0
  %v475 = vadd.f32 %v378, %v474
  %v476 = vpop.f32.mrb[0].mxu0
  %477 = vmatprep.mubr.f32.mxu0 0.0
  %478 = vmatmul.mubr.f32.gmra.mrb[0].mxu0 %v400
  %v479 = vpop.f32.mrb[0].mxu0
  %v480 = vadd.f32 %v383, %v479
  %v481 = vpop.f32.mrb[0].mxu0
  %482 = vmatprep.mubr.f32.mxu0 0.0
  %483 = vmatmul.mubr.f32.gmra.mrb[0].mxu0 %v403
  %v484 = vpop.f32.mrb[0].mxu0
  %v485 = vadd.f32 %v388, %v484
  %v486 = vpop.f32.mrb[0].mxu0
  %487 = vmatprep.mubr.f32.mxu0 0.0
  %488 = vmatmul.mubr.f32.gmra.mrb[0].mxu0 %v406
  %v489 = vpop.f32.mrb[0].mxu0
  %v490 = vadd.f32 %v393, %v489
  %v491 = vpop.f32.mrb[0].mxu0
  %492 = vdwg.mxu0
  %v493 = vsel %vm199, %v475, 0.0
  %494 = vadd.xlane.f32.xlu0 %v493
  %v495 = vpop.xlane.xlu0 %494
  %v496 = vsel %vm199, %v480, 0.0
  %497 = vadd.xlane.f32.xlu0 %v496
  %v498 = vpop.xlane.xlu0 %497
  %v499 = vsel %vm199, %v485, 0.0
  %500 = vadd.xlane.f32.xlu0 %v499
  %v501 = vpop.xlane.xlu0 %500
  %v502 = vsel %vm199, %v490, 0.0
  %503 = vadd.xlane.f32.xlu0 %v502
  %v504 = vpop.xlane.xlu0 %503
  %v505 = vrcp.pop 44.0
  %v506 = vmul.f32 %v495, %v505
  %v507 = vmul.f32 %v498, %v505
  %v508 = vmul.f32 %v501, %v505
  %v509 = vmul.f32 %v504, %v505
  %v510 = vmul.f32 %v475, %v475
  %v511 = vmul.f32 %v480, %v480
  %v512 = vmul.f32 %v485, %v485
  %v513 = vmul.f32 %v490, %v490
  %v514 = vsel %vm199, %v510, 0.0
  %515 = vadd.xlane.f32.xlu0 %v514
  %v516 = vpop.xlane.xlu0 %515
  %v517 = vsel %vm199, %v511, 0.0
  %518 = vadd.xlane.f32.xlu0 %v517
  %v519 = vpop.xlane.xlu0 %518
  %v520 = vsel %vm199, %v512, 0.0
  %521 = vadd.xlane.f32.xlu0 %v520
  %v522 = vpop.xlane.xlu0 %521
  %v523 = vsel %vm199, %v513, 0.0
  %524 = vadd.xlane.f32.xlu0 %v523
  %v525 = vpop.xlane.xlu0 %524
  %v526 = vmul.f32 %v516, %v505
  %v527 = vmul.f32 %v519, %v505
  %v528 = vmul.f32 %v522, %v505
  %v529 = vmul.f32 %v525, %v505
  %v530 = vmul.f32 %v506, %v506
  %v531 = vmul.f32 %v507, %v507
  %v532 = vmul.f32 %v508, %v508
  %v533 = vmul.f32 %v509, %v509
  %v534 = vsub.f32 %v526, %v530
  %v535 = vsub.f32 %v527, %v531
  %v536 = vsub.f32 %v528, %v532
  %v537 = vsub.f32 %v529, %v533
  %v538 = vsub.f32 %v475, %v506
  %v539 = vsub.f32 %v480, %v507
  %v540 = vsub.f32 %v485, %v508
  %v541 = vsub.f32 %v490, %v509
  %v542 = vadd.f32 %v534, 1e-05
  %v543 = vadd.f32 %v535, 1e-05
  %v544 = vadd.f32 %v536, 1e-05
  %v545 = vadd.f32 %v537, 1e-05
  %v546 = vrsqrt.pop %v542
  %v547 = vrsqrt.pop %v543
  %v548 = vrsqrt.pop %v544
  %v549 = vrsqrt.pop %v545
  %v550 = vmul.f32 %v538, %v546
  %v551 = vmul.f32 %v539, %v547
  %v552 = vmul.f32 %v540, %v548
  %v553 = vmul.f32 %v541, %v549
  %v555 = vsel %vm199, %v550, 0
  %v558 = vsel %vm199, %v551, 0
  %v561 = vsel %vm199, %v552, 0
  %v564 = vsel %vm199, %v553, 0
  %566 = vmatprep.subr.mxu0 0.0
  %567 = vmatpush1.msra.mxu0 %v86
  %568 = vmatprep.subr.mxu0 0.0
  %569 = vmatpush1.msra.mxu0 %v87
  %570 = vmatprep.subr.mxu0 0.0
  %571 = vmatpush1.msra.mxu0 %v88
  %572 = vmatprep.subr.mxu0 0.0
  %573 = vmatpush1.msra.mxu0 %v89
  %574 = vmatprep.subr.mxu0 0.0
  %575 = vmatpush1.msra.mxu0 %v90
  %576 = vmatprep.subr.mxu0 0.0
  %577 = vmatpush1.msra.mxu0 %v208
  %578 = vmatprep.subr.mxu0 0.0
  %579 = vmatpush1.msra.mxu0 0.0
  %580 = vmatprep.subr.mxu0 0.0
  %581 = vmatpush1.msra.mxu0 0.0
  %582 = vmatprep.subr.mxu0 0.0
  %583 = vmatpush1.msra.mxu0 0.0
  %584 = vmatprep.subr.mxu0 0.0
  %585 = vmatpush1.msra.mxu0 0.0
  %586 = vmatprep.subr.mxu0 0.0
  %587 = vmatpush1.msra.mxu0 0.0
  %588 = vmatprep.subr.mxu0 0.0
  %589 = vmatpush1.msra.mxu0 0.0
  %590 = vmatprep.subr.mxu0 0.0
  %591 = vmatpush1.msra.mxu0 0.0
  %592 = vmatprep.subr.mxu0 0.0
  %593 = vmatpush1.msra.mxu0 0.0
  %594 = vmatprep.subr.mxu0 0.0
  %595 = vmatpush1.msra.mxu0 0.0
  %596 = vmatprep.subr.mxu0 0.0
  %597 = vmatpush1.msra.mxu0 0.0
  %598 = vmatprep.subr.mxu0 0.0
  %599 = vmatpush1.msra.mxu0 0.0
  %600 = vmatprep.subr.mxu0 0.0
  %601 = vmatpush1.msra.mxu0 0.0
  %602 = vmatprep.subr.mxu0 0.0
  %603 = vmatpush1.msra.mxu0 0.0
  %604 = vmatprep.subr.mxu0 0.0
  %605 = vmatpush1.msra.mxu0 0.0
  %606 = vmatprep.subr.mxu0 0.0
  %607 = vmatpush1.msra.mxu0 0.0
  %608 = vmatprep.subr.mxu0 0.0
  %609 = vmatpush1.msra.mxu0 0.0
  %610 = vmatprep.subr.mxu0 0.0
  %611 = vmatpush1.msra.mxu0 0.0
  %612 = vmatprep.subr.mxu0 0.0
  %613 = vmatpush1.msra.mxu0 0.0
  %614 = vmatprep.subr.mxu0 0.0
  %615 = vmatpush1.msra.mxu0 0.0
  %616 = vmatprep.subr.mxu0 0.0
  %617 = vmatpush1.msra.mxu0 0.0
  %618 = vmatprep.subr.mxu0 0.0
  %619 = vmatpush1.msra.mxu0 0.0
  %620 = vmatprep.subr.mxu0 0.0
  %621 = vmatpush1.msra.mxu0 0.0
  %622 = vmatprep.subr.mxu0 0.0
  %623 = vmatpush1.msra.mxu0 0.0
  %624 = vmatprep.subr.mxu0 0.0
  %625 = vmatpush1.msra.mxu0 0.0
  %626 = vmatprep.subr.mxu0 0.0
  %627 = vmatpush1.msra.mxu0 0.0
  %628 = vmatprep.subr.mxu0 0.0
  %629 = vmatpush1.msra.mxu0 0.0
  %630 = vmatprep.mubr.f32.mxu0 0.0
  %631 = vmatmul.mubr.f32.gmra.mrb[0].mxu0 %v555
  %v632 = vpop.f32.mrb[0].mxu0
  %v633 = vadd.f32 0.0, %v632
  %v634 = vpop.f32.mrb[0].mxu0
  %635 = vmatprep.mubr.f32.mxu0 0.0
  %636 = vmatmul.mubr.f32.gmra.mrb[0].mxu0 %v558
  %v637 = vpop.f32.mrb[0].mxu0
  %v638 = vadd.f32 0.0, %v637
  %v639 = vpop.f32.mrb[0].mxu0
  %640 = vmatprep.mubr.f32.mxu0 0.0
  %641 = vmatmul.mubr.f32.gmra.mrb[0].mxu0 %v561
  %v642 = vpop.f32.mrb[0].mxu0
  %v643 = vadd.f32 0.0, %v642
  %v644 = vpop.f32.mrb[0].mxu0
  %645 = vmatprep.mubr.f32.mxu0 0.0
  %646 = vmatmul.mubr.f32.gmra.mrb[0].mxu0 %v564
  %v647 = vpop.f32.mrb[0].mxu0
  %v648 = vadd.f32 0.0, %v647
  %v649 = vpop.f32.mrb[0].mxu0
  %650 = vdwg.mxu0
  %651 = vmatprep.subr.mxu0 0.0
  %652 = vmatpush1.msra.mxu0 %v92
  %653 = vmatprep.subr.mxu0 0.0
  %654 = vmatpush1.msra.mxu0 %v93
  %655 = vmatprep.subr.mxu0 0.0
  %656 = vmatpush1.msra.mxu0 %v94
  %657 = vmatprep.subr.mxu0 0.0
  %658 = vmatpush1.msra.mxu0 %v95
  %659 = vmatprep.subr.mxu0 0.0
  %660 = vmatpush1.msra.mxu0 %v96
  %661 = vmatprep.subr.mxu0 0.0
  %662 = vmatpush1.msra.mxu0 %v286
  %663 = vmatprep.subr.mxu0 0.0
  %664 = vmatpush1.msra.mxu0 0.0
  %665 = vmatprep.subr.mxu0 0.0
  %666 = vmatpush1.msra.mxu0 0.0
  %667 = vmatprep.subr.mxu0 0.0
  %668 = vmatpush1.msra.mxu0 0.0
  %669 = vmatprep.subr.mxu0 0.0
  %670 = vmatpush1.msra.mxu0 0.0
  %671 = vmatprep.subr.mxu0 0.0
  %672 = vmatpush1.msra.mxu0 0.0
  %673 = vmatprep.subr.mxu0 0.0
  %674 = vmatpush1.msra.mxu0 0.0
  %675 = vmatprep.subr.mxu0 0.0
  %676 = vmatpush1.msra.mxu0 0.0
  %677 = vmatprep.subr.mxu0 0.0
  %678 = vmatpush1.msra.mxu0 0.0
  %679 = vmatprep.subr.mxu0 0.0
  %680 = vmatpush1.msra.mxu0 0.0
  %681 = vmatprep.subr.mxu0 0.0
  %682 = vmatpush1.msra.mxu0 0.0
  %683 = vmatprep.subr.mxu0 0.0
  %684 = vmatpush1.msra.mxu0 0.0
  %685 = vmatprep.subr.mxu0 0.0
  %686 = vmatpush1.msra.mxu0 0.0
  %687 = vmatprep.subr.mxu0 0.0
  %688 = vmatpush1.msra.mxu0 0.0
  %689 = vmatprep.subr.mxu0 0.0
  %690 = vmatpush1.msra.mxu0 0.0
  %691 = vmatprep.subr.mxu0 0.0
  %692 = vmatpush1.msra.mxu0 0.0
  %693 = vmatprep.subr.mxu0 0.0
  %694 = vmatpush1.msra.mxu0 0.0
  %695 = vmatprep.subr.mxu0 0.0
  %696 = vmatpush1.msra.mxu0 0.0
  %697 = vmatprep.subr.mxu0 0.0
  %698 = vmatpush1.msra.mxu0 0.0
  %699 = vmatprep.subr.mxu0 0.0
  %700 = vmatpush1.msra.mxu0 0.0
  %701 = vmatprep.subr.mxu0 0.0
  %702 = vmatpush1.msra.mxu0 0.0
  %703 = vmatprep.subr.mxu0 0.0
  %704 = vmatpush1.msra.mxu0 0.0
  %705 = vmatprep.subr.mxu0 0.0
  %706 = vmatpush1.msra.mxu0 0.0
  %707 = vmatprep.subr.mxu0 0.0
  %708 = vmatpush1.msra.mxu0 0.0
  %709 = vmatprep.subr.mxu0 0.0
  %710 = vmatpush1.msra.mxu0 0.0
  %711 = vmatprep.subr.mxu0 0.0
  %712 = vmatpush1.msra.mxu0 0.0
  %713 = vmatprep.subr.mxu0 0.0
  %714 = vmatpush1.msra.mxu0 0.0
  %715 = vmatprep.mubr.f32.mxu0 0.0
  %716 = vmatmul.mubr.f32.gmra.mrb[0].mxu0 %v555
  %v717 = vpop.f32.mrb[0].mxu0
  %v718 = vadd.f32 0.0, %v717
  %v719 = vpop.f32.mrb[0].mxu0
  %720 = vmatprep.mubr.f32.mxu0 0.0
  %721 = vmatmul.mubr.f32.gmra.mrb[0].mxu0 %v558
  %v722 = vpop.f32.mrb[0].mxu0
  %v723 = vadd.f32 0.0, %v722
  %v724 = vpop.f32.mrb[0].mxu0
  %725 = vmatprep.mubr.f32.mxu0 0.0
  %726 = vmatmul.mubr.f32.gmra.mrb[0].mxu0 %v561
  %v727 = vpop.f32.mrb[0].mxu0
  %v728 = vadd.f32 0.0, %v727
  %v729 = vpop.f32.mrb[0].mxu0
  %730 = vmatprep.mubr.f32.mxu0 0.0
  %731 = vmatmul.mubr.f32.gmra.mrb[0].mxu0 %v564
  %v732 = vpop.f32.mrb[0].mxu0
  %v733 = vadd.f32 0.0, %v732
  %v734 = vpop.f32.mrb[0].mxu0
  %735 = vdwg.mxu0
  %736 = vst.msk [vmem:[#allocation3] sm:$0xff] %vm199, %v633
  %737 = vst.msk [vmem:[#allocation3 + $0x8] sm:$0xff] %vm199, %v638
  %738 = vst.msk [vmem:[#allocation3 + $0x10] sm:$0xff] %vm199, %v643
  %739 = vst.msk [vmem:[#allocation3 + $0x18] sm:$0xff] %vm199, %v648
  %740 = vst.msk [vmem:[#allocation3 + $0x20] sm:$0xff] %vm199, %v550
  %741 = vst.msk [vmem:[#allocation3 + $0x28] sm:$0xff] %vm199, %v551
  %742 = vst.msk [vmem:[#allocation3 + $0x30] sm:$0xff] %vm199, %v552
  %743 = vst.msk [vmem:[#allocation3 + $0x38] sm:$0xff] %vm199, %v553
  %744 = vst.msk [vmem:[#allocation3 + $0x40] sm:$0xff] %vm199, %v718
  %745 = vst.msk [vmem:[#allocation3 + $0x48] sm:$0xff] %vm199, %v723
  %746 = vst.msk [vmem:[#allocation3 + $0x50] sm:$0xff] %vm199, %v728
  %747 = vst.msk [vmem:[#allocation3 + $0x58] sm:$0xff] %vm199, %v733
  %v748 = vld [vmem:[#allocation3] sm:$0xff]
  %v749 = vld [vmem:[#allocation3 + $0x8] sm:$0xff]
  %v750 = vld [vmem:[#allocation3 + $0x10] sm:$0xff]
  %v751 = vld [vmem:[#allocation3 + $0x18] sm:$0xff]
  %v752 = vld [vmem:[#allocation3 + $0x20] sm:$0xff]
  %v753 = vld [vmem:[#allocation3 + $0x28] sm:$0xff]
  %v754 = vld [vmem:[#allocation3 + $0x30] sm:$0xff]
  %v755 = vld [vmem:[#allocation3 + $0x38] sm:$0xff]
  %v756 = vld [vmem:[#allocation3 + $0x40] sm:$0xff]
  %v757 = vld [vmem:[#allocation3 + $0x48] sm:$0xff]
  %v758 = vld [vmem:[#allocation3 + $0x50] sm:$0xff]
  %v759 = vld [vmem:[#allocation3 + $0x58] sm:$0xff]
  %761 = vset.pattern.permute.xlu0 0
  %762 = vperm.xlu0 %761, %v36
  %v763 = vpop.permute.xlu0 %762
  %766 = vset.pattern.permute.xlu0 0
  %767 = vperm.xlu0 %766, %v37
  %v768 = vpop.permute.xlu0 %767
  %771 = vset.pattern.permute.xlu0 0
  %772 = vperm.xlu0 %771, %v38
  %v773 = vpop.permute.xlu0 %772
  %776 = vset.pattern.permute.xlu0 0
  %777 = vperm.xlu0 %776, %v39
  %v778 = vpop.permute.xlu0 %777
  %781 = vset.pattern.permute.xlu0 0
  %782 = vperm.xlu0 %781, %v40
  %v783 = vpop.permute.xlu0 %782
  %786 = vset.pattern.permute.xlu0 0
  %787 = vperm.xlu0 %786, %v41
  %v788 = vpop.permute.xlu0 %787
  %vm790 = vcmask 785408
  %v792 = vsel %vm790, %v17, 0
  %v795 = vsel %vm790, %v18, 0
  %v798 = vsel %vm790, %v19, 0
  %v801 = vsel %vm790, %v20, 0
  %v804 = vsel %vm790, %v21, 0
  %v807 = vsel %vm790, %v22, 0
  %809 = vmatprep.subr.mxu0 0.0
  %810 = vmatpush1.msra.mxu0 %v748
  %811 = vmatprep.subr.mxu0 0.0
  %812 = vmatpush1.msra.mxu0 %v749
  %813 = vmatprep.subr.mxu0 0.0
  %814 = vmatpush1.msra.mxu0 %v750
  %815 = vmatprep.subr.mxu0 0.0
  %816 = vmatpush1.msra.mxu0 %v751
  %817 = vmatprep.subr.mxu0 0.0
  %818 = vmatpush1.msra.mxu0 %v752
  %819 = vmatprep.subr.mxu0 0.0
  %820 = vmatpush1.msra.mxu0 %v753
  %821 = vmatprep.subr.mxu0 0.0
  %822 = vmatpush1.msra.mxu0 %v754
  %823 = vmatprep.subr.mxu0 0.0
  %824 = vmatpush1.msra.mxu0 %v755
  %825 = vmatprep.subr.mxu0 0.0
  %826 = vmatpush1.msra.mxu0 %v756
  %827 = vmatprep.subr.mxu0 0.0
  %828 = vmatpush1.msra.mxu0 %v757
  %829 = vmatprep.subr.mxu0 0.0
  %830 = vmatpush1.msra.mxu0 %v758
  %831 = vmatprep.subr.mxu0 0.0
  %832 = vmatpush1.msra.mxu0 %v759
  %833 = vmatprep.subr.mxu0 0.0
  %834 = vmatpush1.msra.mxu0 0.0
  %835 = vmatprep.subr.mxu0 0.0
  %836 = vmatpush1.msra.mxu0 0.0
  %837 = vmatprep.subr.mxu0 0.0
  %838 = vmatpush1.msra.mxu0 0.0
  %839 = vmatprep.subr.mxu0 0.0
  %840 = vmatpush1.msra.mxu0 0.0
  %841 = vmatprep.subr.mxu0 0.0
  %842 = vmatpush1.msra.mxu0 0.0
  %843 = vmatprep.subr.mxu0 0.0
  %844 = vmatpush1.msra.mxu0 0.0
  %845 = vmatprep.subr.mxu0 0.0
  %846 = vmatpush1.msra.mxu0 0.0
  %847 = vmatprep.subr.mxu0 0.0
  %848 = vmatpush1.msra.mxu0 0.0
  %849 = vmatprep.subr.mxu0 0.0
  %850 = vmatpush1.msra.mxu0 0.0
  %851 = vmatprep.subr.mxu0 0.0
  %852 = vmatpush1.msra.mxu0 0.0
  %853 = vmatprep.subr.mxu0 0.0
  %854 = vmatpush1.msra.mxu0 0.0
  %855 = vmatprep.subr.mxu0 0.0
  %856 = vmatpush1.msra.mxu0 0.0
  %857 = vmatprep.subr.mxu0 0.0
  %858 = vmatpush1.msra.mxu0 0.0
  %859 = vmatprep.subr.mxu0 0.0
  %860 = vmatpush1.msra.mxu0 0.0
  %861 = vmatprep.subr.mxu0 0.0
  %862 = vmatpush1.msra.mxu0 0.0
  %863 = vmatprep.subr.mxu0 0.0
  %864 = vmatpush1.msra.mxu0 0.0
  %865 = vmatprep.subr.mxu0 0.0
  %866 = vmatpush1.msra.mxu0 0.0
  %867 = vmatprep.subr.mxu0 0.0
  %868 = vmatpush1.msra.mxu0 0.0
  %869 = vmatprep.subr.mxu0 0.0
  %870 = vmatpush1.msra.mxu0 0.0
  %871 = vmatprep.subr.mxu0 0.0
  %872 = vmatpush1.msra.mxu0 0.0
  %873 = vmatprep.mubr.f32.mxu0 0.0
  %874 = vmatmul.mubr.f32.gmra.mrb[0].mxu0 %v792
  %v875 = vpop.f32.mrb[0].mxu0
  %v876 = vadd.f32 %v763, %v875
  %v877 = vpop.f32.mrb[0].mxu0
  %878 = vmatprep.mubr.f32.mxu0 0.0
  %879 = vmatmul.mubr.f32.gmra.mrb[0].mxu0 %v795
  %v880 = vpop.f32.mrb[0].mxu0
  %v881 = vadd.f32 %v768, %v880
  %v882 = vpop.f32.mrb[0].mxu0
  %883 = vmatprep.mubr.f32.mxu0 0.0
  %884 = vmatmul.mubr.f32.gmra.mrb[0].mxu0 %v798
  %v885 = vpop.f32.mrb[0].mxu0
  %v886 = vadd.f32 %v773, %v885
  %v887 = vpop.f32.mrb[0].mxu0
  %888 = vmatprep.mubr.f32.mxu0 0.0
  %889 = vmatmul.mubr.f32.gmra.mrb[0].mxu0 %v801
  %v890 = vpop.f32.mrb[0].mxu0
  %v891 = vadd.f32 %v778, %v890
  %v892 = vpop.f32.mrb[0].mxu0
  %893 = vmatprep.mubr.f32.mxu0 0.0
  %894 = vmatmul.mubr.f32.gmra.mrb[0].mxu0 %v804
  %v895 = vpop.f32.mrb[0].mxu0
  %v896 = vadd.f32 %v783, %v895
  %v897 = vpop.f32.mrb[0].mxu0
  %898 = vmatprep.mubr.f32.mxu0 0.0
  %899 = vmatmul.mubr.f32.gmra.mrb[0].mxu0 %v807
  %v900 = vpop.f32.mrb[0].mxu0
  %v901 = vadd.f32 %v788, %v900
  %v902 = vpop.f32.mrb[0].mxu0
  %903 = vdwg.mxu0
  %v904 = vsel %vm199, %v876, 0.0
  %905 = vadd.xlane.f32.xlu0 %v904
  %v906 = vpop.xlane.xlu0 %905
  %v907 = vsel %vm199, %v881, 0.0
  %908 = vadd.xlane.f32.xlu0 %v907
  %v909 = vpop.xlane.xlu0 %908
  %v910 = vsel %vm199, %v886, 0.0
  %911 = vadd.xlane.f32.xlu0 %v910
  %v912 = vpop.xlane.xlu0 %911
  %v913 = vsel %vm199, %v891, 0.0
  %914 = vadd.xlane.f32.xlu0 %v913
  %v915 = vpop.xlane.xlu0 %914
  %v916 = vsel %vm199, %v896, 0.0
  %917 = vadd.xlane.f32.xlu0 %v916
  %v918 = vpop.xlane.xlu0 %917
  %v919 = vsel %vm199, %v901, 0.0
  %920 = vadd.xlane.f32.xlu0 %v919
  %v921 = vpop.xlane.xlu0 %920
  %v922 = vmul.f32 %v906, %v505
  %v923 = vmul.f32 %v909, %v505
  %v924 = vmul.f32 %v912, %v505
  %v925 = vmul.f32 %v915, %v505
  %v926 = vmul.f32 %v918, %v505
  %v927 = vmul.f32 %v921, %v505
  %v928 = vmul.f32 %v876, %v876
  %v929 = vmul.f32 %v881, %v881
  %v930 = vmul.f32 %v886, %v886
  %v931 = vmul.f32 %v891, %v891
  %v932 = vmul.f32 %v896, %v896
  %v933 = vmul.f32 %v901, %v901
  %v934 = vsel %vm199, %v928, 0.0
  %935 = vadd.xlane.f32.xlu0 %v934
  %v936 = vpop.xlane.xlu0 %935
  %v937 = vsel %vm199, %v929, 0.0
  %938 = vadd.xlane.f32.xlu0 %v937
  %v939 = vpop.xlane.xlu0 %938
  %v940 = vsel %vm199, %v930, 0.0
  %941 = vadd.xlane.f32.xlu0 %v940
  %v942 = vpop.xlane.xlu0 %941
  %v943 = vsel %vm199, %v931, 0.0
  %944 = vadd.xlane.f32.xlu0 %v943
  %v945 = vpop.xlane.xlu0 %944
  %v946 = vsel %vm199, %v932, 0.0
  %947 = vadd.xlane.f32.xlu0 %v946
  %v948 = vpop.xlane.xlu0 %947
  %v949 = vsel %vm199, %v933, 0.0
  %950 = vadd.xlane.f32.xlu0 %v949
  %v951 = vpop.xlane.xlu0 %950
  %v952 = vmul.f32 %v936, %v505
  %v953 = vmul.f32 %v939, %v505
  %v954 = vmul.f32 %v942, %v505
  %v955 = vmul.f32 %v945, %v505
  %v956 = vmul.f32 %v948, %v505
  %v957 = vmul.f32 %v951, %v505
  %v958 = vmul.f32 %v922, %v922
  %v959 = vmul.f32 %v923, %v923
  %v960 = vmul.f32 %v924, %v924
  %v961 = vmul.f32 %v925, %v925
  %v962 = vmul.f32 %v926, %v926
  %v963 = vmul.f32 %v927, %v927
  %v964 = vsub.f32 %v952, %v958
  %v965 = vsub.f32 %v953, %v959
  %v966 = vsub.f32 %v954, %v960
  %v967 = vsub.f32 %v955, %v961
  %v968 = vsub.f32 %v956, %v962
  %v969 = vsub.f32 %v957, %v963
  %v970 = vsub.f32 %v876, %v922
  %v971 = vsub.f32 %v881, %v923
  %v972 = vsub.f32 %v886, %v924
  %v973 = vsub.f32 %v891, %v925
  %v974 = vsub.f32 %v896, %v926
  %v975 = vsub.f32 %v901, %v927
  %v976 = vadd.f32 %v964, 1e-05
  %v977 = vadd.f32 %v965, 1e-05
  %v978 = vadd.f32 %v966, 1e-05
  %v979 = vadd.f32 %v967, 1e-05
  %v980 = vadd.f32 %v968, 1e-05
  %v981 = vadd.f32 %v969, 1e-05
  %v982 = vrsqrt.pop %v976
  %v983 = vrsqrt.pop %v977
  %v984 = vrsqrt.pop %v978
  %v985 = vrsqrt.pop %v979
  %v986 = vrsqrt.pop %v980
  %v987 = vrsqrt.pop %v981
  %v988 = vmul.f32 %v970, %v982
  %v989 = vmul.f32 %v971, %v983
  %v990 = vmul.f32 %v972, %v984
  %v991 = vmul.f32 %v973, %v985
  %v992 = vmul.f32 %v974, %v986
  %v993 = vmul.f32 %v975, %v987
  %v994 = vmul.u32 %v57, 22
  %vm995 = vcmp.ge.s32.totalorder %v50, %v994
  %vm996 = vcmp.ge.s32.totalorder %v51, %v994
  %vm997 = vcmp.ge.s32.totalorder %v52, %v994
  %vm998 = vcmp.ge.s32.totalorder %v53, %v994
  %vm999 = vcmp.ge.s32.totalorder %v54, %v994
  %vm1000 = vcmp.ge.s32.totalorder %v55, %v994
  %v1001 = vmul.u32 %v65, 22
  %vm1002 = vcmp.lt.s32.totalorder %v50, %v1001
  %vm1003 = vcmp.lt.s32.totalorder %v51, %v1001
  %vm1004 = vcmp.lt.s32.totalorder %v52, %v1001
  %vm1005 = vcmp.lt.s32.totalorder %v53, %v1001
  %vm1006 = vcmp.lt.s32.totalorder %v54, %v1001
  %vm1007 = vcmp.lt.s32.totalorder %v55, %v1001
  %vm1008 = vmand %vm995, %vm1002
  %vm1009 = vmand %vm996, %vm1003
  %vm1010 = vmand %vm997, %vm1004
  %vm1011 = vmand %vm998, %vm1005
  %vm1012 = vmand %vm999, %vm1006
  %vm1013 = vmand %vm1000, %vm1007
  %v1014 = vsel %vm1008, 1.0, 0.0
  %v1015 = vsel %vm1009, 1.0, 0.0
  %v1016 = vsel %vm1010, 1.0, 0.0
  %v1017 = vsel %vm1011, 1.0, 0.0
  %v1018 = vsel %vm1012, 1.0, 0.0
  %v1019 = vsel %vm1013, 1.0, 0.0
  %v1021 = vsel %vm199, %v988, 0
  %v1024 = vsel %vm199, %v989, 0
  %v1027 = vsel %vm199, %v990, 0
  %v1030 = vsel %vm199, %v991, 0
  %v1033 = vsel %vm199, %v992, 0
  %v1036 = vsel %vm199, %v993, 0
  %v1039 = vsel %vm206, %v1019, 0
  %1041 = vmatprep.subr.mxu0 0.0
  %1042 = vmatpush1.msra.mxu0 %v1014
  %1043 = vmatprep.subr.mxu0 0.0
  %1044 = vmatpush1.msra.mxu0 %v1015
  %1045 = vmatprep.subr.mxu0 0.0
  %1046 = vmatpush1.msra.mxu0 %v1016
  %1047 = vmatprep.subr.mxu0 0.0
  %1048 = vmatpush1.msra.mxu0 %v1017
  %1049 = vmatprep.subr.mxu0 0.0
  %1050 = vmatpush1.msra.mxu0 %v1018
  %1051 = vmatprep.subr.mxu0 0.0
  %1052 = vmatpush1.msra.mxu0 %v1039
  %1053 = vmatprep.subr.mxu0 0.0
  %1054 = vmatpush1.msra.mxu0 0.0
  %1055 = vmatprep.subr.mxu0 0.0
  %1056 = vmatpush1.msra.mxu0 0.0
  %1057 = vmatprep.subr.mxu0 0.0
  %1058 = vmatpush1.msra.mxu0 0.0
  %1059 = vmatprep.subr.mxu0 0.0
  %1060 = vmatpush1.msra.mxu0 0.0
  %1061 = vmatprep.subr.mxu0 0.0
  %1062 = vmatpush1.msra.mxu0 0.0
  %1063 = vmatprep.subr.mxu0 0.0
  %1064 = vmatpush1.msra.mxu0 0.0
  %1065 = vmatprep.subr.mxu0 0.0
  %1066 = vmatpush1.msra.mxu0 0.0
  %1067 = vmatprep.subr.mxu0 0.0
  %1068 = vmatpush1.msra.mxu0 0.0
  %1069 = vmatprep.subr.mxu0 0.0
  %1070 = vmatpush1.msra.mxu0 0.0
  %1071 = vmatprep.subr.mxu0 0.0
  %1072 = vmatpush1.msra.mxu0 0.0
  %1073 = vmatprep.subr.mxu0 0.0
  %1074 = vmatpush1.msra.mxu0 0.0
  %1075 = vmatprep.subr.mxu0 0.0
  %1076 = vmatpush1.msra.mxu0 0.0
  %1077 = vmatprep.subr.mxu0 0.0
  %1078 = vmatpush1.msra.mxu0 0.0
  %1079 = vmatprep.subr.mxu0 0.0
  %1080 = vmatpush1.msra.mxu0 0.0
  %1081 = vmatprep.subr.mxu0 0.0
  %1082 = vmatpush1.msra.mxu0 0.0
  %1083 = vmatprep.subr.mxu0 0.0
  %1084 = vmatpush1.msra.mxu0 0.0
  %1085 = vmatprep.subr.mxu0 0.0
  %1086 = vmatpush1.msra.mxu0 0.0
  %1087 = vmatprep.subr.mxu0 0.0
  %1088 = vmatpush1.msra.mxu0 0.0
  %1089 = vmatprep.subr.mxu0 0.0
  %1090 = vmatpush1.msra.mxu0 0.0
  %1091 = vmatprep.subr.mxu0 0.0
  %1092 = vmatpush1.msra.mxu0 0.0
  %1093 = vmatprep.subr.mxu0 0.0
  %1094 = vmatpush1.msra.mxu0 0.0
  %1095 = vmatprep.subr.mxu0 0.0
  %1096 = vmatpush1.msra.mxu0 0.0
  %1097 = vmatprep.subr.mxu0 0.0
  %1098 = vmatpush1.msra.mxu0 0.0
  %1099 = vmatprep.subr.mxu0 0.0
  %1100 = vmatpush1.msra.mxu0 0.0
  %1101 = vmatprep.subr.mxu0 0.0
  %1102 = vmatpush1.msra.mxu0 0.0
  %1103 = vmatprep.subr.mxu0 0.0
  %1104 = vmatpush1.msra.mxu0 0.0
  %1105 = vmatprep.mubr.f32.mxu0 0.0
  %1106 = vmatmul.mubr.f32.gmra.mrb[0].mxu0 %v1021
  %v1107 = vpop.f32.mrb[0].mxu0
  %v1108 = vadd.f32 0.0, %v1107
  %v1109 = vpop.f32.mrb[0].mxu0
  %1110 = vmatprep.mubr.f32.mxu0 0.0
  %1111 = vmatmul.mubr.f32.gmra.mrb[0].mxu0 %v1024
  %v1112 = vpop.f32.mrb[0].mxu0
  %v1113 = vadd.f32 0.0, %v1112
  %v1114 = vpop.f32.mrb[0].mxu0
  %1115 = vmatprep.mubr.f32.mxu0 0.0
  %1116 = vmatmul.mubr.f32.gmra.mrb[0].mxu0 %v1027
  %v1117 = vpop.f32.mrb[0].mxu0
  %v1118 = vadd.f32 0.0, %v1117
  %v1119 = vpop.f32.mrb[0].mxu0
  %1120 = vmatprep.mubr.f32.mxu0 0.0
  %1121 = vmatmul.mubr.f32.gmra.mrb[0].mxu0 %v1030
  %v1122 = vpop.f32.mrb[0].mxu0
  %v1123 = vadd.f32 0.0, %v1122
  %v1124 = vpop.f32.mrb[0].mxu0
  %1125 = vmatprep.mubr.f32.mxu0 0.0
  %1126 = vmatmul.mubr.f32.gmra.mrb[0].mxu0 %v1033
  %v1127 = vpop.f32.mrb[0].mxu0
  %v1128 = vadd.f32 0.0, %v1127
  %v1129 = vpop.f32.mrb[0].mxu0
  %1130 = vmatprep.mubr.f32.mxu0 0.0
  %1131 = vmatmul.mubr.f32.gmra.mrb[0].mxu0 %v1036
  %v1132 = vpop.f32.mrb[0].mxu0
  %v1133 = vadd.f32 0.0, %v1132
  %v1134 = vpop.f32.mrb[0].mxu0
  %1135 = vdwg.mxu0
  %v1136 = vmul.f32 %v1108, 0.045454547
  %v1137 = vmul.f32 %v1113, 0.045454547
  %v1138 = vmul.f32 %v1118, 0.045454547
  %v1139 = vmul.f32 %v1123, 0.045454547
  %v1140 = vmul.f32 %v1128, 0.045454547
  %v1141 = vmul.f32 %v1133, 0.045454547
  %1143 = vset.pattern.permute.xlu0 0
  %1144 = vperm.xlu0 %1143, %v42
  %v1145 = vpop.permute.xlu0 %1144
  %1148 = vset.pattern.permute.xlu0 0
  %1149 = vperm.xlu0 %1148, %v43
  %v1150 = vpop.permute.xlu0 %1149
  %1153 = vset.pattern.permute.xlu0 0
  %1154 = vperm.xlu0 %1153, %v44
  %v1155 = vpop.permute.xlu0 %1154
  %1158 = vset.pattern.permute.xlu0 0
  %1159 = vperm.xlu0 %1158, %v45
  %v1160 = vpop.permute.xlu0 %1159
  %1163 = vset.pattern.permute.xlu0 0
  %1164 = vperm.xlu0 %1163, %v46
  %v1165 = vpop.permute.xlu0 %1164
  %1168 = vset.pattern.permute.xlu0 0
  %1169 = vperm.xlu0 %1168, %v47
  %v1170 = vpop.permute.xlu0 %1169
  %v1173 = vsel %vm395, %v23, 0
  %v1176 = vsel %vm395, %v24, 0
  %v1179 = vsel %vm395, %v25, 0
  %v1182 = vsel %vm395, %v26, 0
  %v1185 = vsel %vm395, %v27, 0
  %v1188 = vsel %vm395, %v28, 0
  %1190 = vmatprep.subr.mxu0 0.0
  %1191 = vmatpush1.msra.mxu0 %v1136
  %1192 = vmatprep.subr.mxu0 0.0
  %1193 = vmatpush1.msra.mxu0 %v1137
  %1194 = vmatprep.subr.mxu0 0.0
  %1195 = vmatpush1.msra.mxu0 %v1138
  %1196 = vmatprep.subr.mxu0 0.0
  %1197 = vmatpush1.msra.mxu0 %v1139
  %1198 = vmatprep.subr.mxu0 0.0
  %1199 = vmatpush1.msra.mxu0 %v1140
  %1200 = vmatprep.subr.mxu0 0.0
  %1201 = vmatpush1.msra.mxu0 %v1141
  %1202 = vmatprep.subr.mxu0 0.0
  %1203 = vmatpush1.msra.mxu0 0.0
  %1204 = vmatprep.subr.mxu0 0.0
  %1205 = vmatpush1.msra.mxu0 0.0
  %1206 = vmatprep.subr.mxu0 0.0
  %1207 = vmatpush1.msra.mxu0 0.0
  %1208 = vmatprep.subr.mxu0 0.0
  %1209 = vmatpush1.msra.mxu0 0.0
  %1210 = vmatprep.subr.mxu0 0.0
  %1211 = vmatpush1.msra.mxu0 0.0
  %1212 = vmatprep.subr.mxu0 0.0
  %1213 = vmatpush1.msra.mxu0 0.0
  %1214 = vmatprep.subr.mxu0 0.0
  %1215 = vmatpush1.msra.mxu0 0.0
  %1216 = vmatprep.subr.mxu0 0.0
  %1217 = vmatpush1.msra.mxu0 0.0
  %1218 = vmatprep.subr.mxu0 0.0
  %1219 = vmatpush1.msra.mxu0 0.0
  %1220 = vmatprep.subr.mxu0 0.0
  %1221 = vmatpush1.msra.mxu0 0.0
  %1222 = vmatprep.subr.mxu0 0.0
  %1223 = vmatpush1.msra.mxu0 0.0
  %1224 = vmatprep.subr.mxu0 0.0
  %1225 = vmatpush1.msra.mxu0 0.0
  %1226 = vmatprep.subr.mxu0 0.0
  %1227 = vmatpush1.msra.mxu0 0.0
  %1228 = vmatprep.subr.mxu0 0.0
  %1229 = vmatpush1.msra.mxu0 0.0
  %1230 = vmatprep.subr.mxu0 0.0
  %1231 = vmatpush1.msra.mxu0 0.0
  %1232 = vmatprep.subr.mxu0 0.0
  %1233 = vmatpush1.msra.mxu0 0.0
  %1234 = vmatprep.subr.mxu0 0.0
  %1235 = vmatpush1.msra.mxu0 0.0
  %1236 = vmatprep.subr.mxu0 0.0
  %1237 = vmatpush1.msra.mxu0 0.0
  %1238 = vmatprep.subr.mxu0 0.0
  %1239 = vmatpush1.msra.mxu0 0.0
  %1240 = vmatprep.subr.mxu0 0.0
  %1241 = vmatpush1.msra.mxu0 0.0
  %1242 = vmatprep.subr.mxu0 0.0
  %1243 = vmatpush1.msra.mxu0 0.0
  %1244 = vmatprep.subr.mxu0 0.0
  %1245 = vmatpush1.msra.mxu0 0.0
  %1246 = vmatprep.subr.mxu0 0.0
  %1247 = vmatpush1.msra.mxu0 0.0
  %1248 = vmatprep.subr.mxu0 0.0
  %1249 = vmatpush1.msra.mxu0 0.0
  %1250 = vmatprep.subr.mxu0 0.0
  %1251 = vmatpush1.msra.mxu0 0.0
  %1252 = vmatprep.subr.mxu0 0.0
  %1253 = vmatpush1.msra.mxu0 0.0
  %1254 = vmatprep.mubr.f32.mxu0 0.0
  %1255 = vmatmul.mubr.f32.gmra.mrb[0].mxu0 %v1173
  %v1256 = vpop.f32.mrb[0].mxu0
  %v1257 = vadd.f32 %v1145, %v1256
  %v1258 = vpop.f32.mrb[0].mxu0
  %1259 = vmatprep.mubr.f32.mxu0 0.0
  %1260 = vmatmul.mubr.f32.gmra.mrb[0].mxu0 %v1176
  %v1261 = vpop.f32.mrb[0].mxu0
  %v1262 = vadd.f32 %v1150, %v1261
  %v1263 = vpop.f32.mrb[0].mxu0
  %1264 = vmatprep.mubr.f32.mxu0 0.0
  %1265 = vmatmul.mubr.f32.gmra.mrb[0].mxu0 %v1179
  %v1266 = vpop.f32.mrb[0].mxu0
  %v1267 = vadd.f32 %v1155, %v1266
  %v1268 = vpop.f32.mrb[0].mxu0
  %1269 = vmatprep.mubr.f32.mxu0 0.0
  %1270 = vmatmul.mubr.f32.gmra.mrb[0].mxu0 %v1182
  %v1271 = vpop.f32.mrb[0].mxu0
  %v1272 = vadd.f32 %v1160, %v1271
  %v1273 = vpop.f32.mrb[0].mxu0
  %1274 = vmatprep.mubr.f32.mxu0 0.0
  %1275 = vmatmul.mubr.f32.gmra.mrb[0].mxu0 %v1185
  %v1276 = vpop.f32.mrb[0].mxu0
  %v1277 = vadd.f32 %v1165, %v1276
  %v1278 = vpop.f32.mrb[0].mxu0
  %1279 = vmatprep.mubr.f32.mxu0 0.0
  %1280 = vmatmul.mubr.f32.gmra.mrb[0].mxu0 %v1188
  %v1281 = vpop.f32.mrb[0].mxu0
  %v1282 = vadd.f32 %v1170, %v1281
  %v1283 = vpop.f32.mrb[0].mxu0
  %1284 = vdwg.mxu0
  %1286 = vset.pattern.permute.xlu0 0
  %1287 = vperm.xlu0 %1286, %v48
  %v1288 = vpop.permute.xlu0 %1287
  %v1291 = vsel %vm395, %v29, 0
  %1293 = vmatprep.subr.mxu0 0.0
  %1294 = vmatpush1.msra.mxu0 %v1257
  %1295 = vmatprep.subr.mxu0 0.0
  %1296 = vmatpush1.msra.mxu0 %v1262
  %1297 = vmatprep.subr.mxu0 0.0
  %1298 = vmatpush1.msra.mxu0 %v1267
  %1299 = vmatprep.subr.mxu0 0.0
  %1300 = vmatpush1.msra.mxu0 %v1272
  %1301 = vmatprep.subr.mxu0 0.0
  %1302 = vmatpush1.msra.mxu0 %v1277
  %1303 = vmatprep.subr.mxu0 0.0
  %1304 = vmatpush1.msra.mxu0 %v1282
  %1305 = vmatprep.subr.mxu0 0.0
  %1306 = vmatpush1.msra.mxu0 0.0
  %1307 = vmatprep.subr.mxu0 0.0
  %1308 = vmatpush1.msra.mxu0 0.0
  %1309 = vmatprep.subr.mxu0 0.0
  %1310 = vmatpush1.msra.mxu0 0.0
  %1311 = vmatprep.subr.mxu0 0.0
  %1312 = vmatpush1.msra.mxu0 0.0
  %1313 = vmatprep.subr.mxu0 0.0
  %1314 = vmatpush1.msra.mxu0 0.0
  %1315 = vmatprep.subr.mxu0 0.0
  %1316 = vmatpush1.msra.mxu0 0.0
  %1317 = vmatprep.subr.mxu0 0.0
  %1318 = vmatpush1.msra.mxu0 0.0
  %1319 = vmatprep.subr.mxu0 0.0
  %1320 = vmatpush1.msra.mxu0 0.0
  %1321 = vmatprep.subr.mxu0 0.0
  %1322 = vmatpush1.msra.mxu0 0.0
  %1323 = vmatprep.subr.mxu0 0.0
  %1324 = vmatpush1.msra.mxu0 0.0
  %1325 = vmatprep.subr.mxu0 0.0
  %1326 = vmatpush1.msra.mxu0 0.0
  %1327 = vmatprep.subr.mxu0 0.0
  %1328 = vmatpush1.msra.mxu0 0.0
  %1329 = vmatprep.subr.mxu0 0.0
  %1330 = vmatpush1.msra.mxu0 0.0
  %1331 = vmatprep.subr.mxu0 0.0
  %1332 = vmatpush1.msra.mxu0 0.0
  %1333 = vmatprep.subr.mxu0 0.0
  %1334 = vmatpush1.msra.mxu0 0.0
  %1335 = vmatprep.subr.mxu0 0.0
  %1336 = vmatpush1.msra.mxu0 0.0
  %1337 = vmatprep.subr.mxu0 0.0
  %1338 = vmatpush1.msra.mxu0 0.0
  %1339 = vmatprep.subr.mxu0 0.0
  %1340 = vmatpush1.msra.mxu0 0.0
  %1341 = vmatprep.subr.mxu0 0.0
  %1342 = vmatpush1.msra.mxu0 0.0
  %1343 = vmatprep.subr.mxu0 0.0
  %1344 = vmatpush1.msra.mxu0 0.0
  %1345 = vmatprep.subr.mxu0 0.0
  %1346 = vmatpush1.msra.mxu0 0.0
  %1347 = vmatprep.subr.mxu0 0.0
  %1348 = vmatpush1.msra.mxu0 0.0
  %1349 = vmatprep.subr.mxu0 0.0
  %1350 = vmatpush1.msra.mxu0 0.0
  %1351 = vmatprep.subr.mxu0 0.0
  %1352 = vmatpush1.msra.mxu0 0.0
  %1353 = vmatprep.subr.mxu0 0.0
  %1354 = vmatpush1.msra.mxu0 0.0
  %1355 = vmatprep.subr.mxu0 0.0
  %1356 = vmatpush1.msra.mxu0 0.0
  %1357 = vmatprep.mubr.f32.mxu0 0.0
  %1358 = vmatmul.mubr.f32.gmra.mrb[0].mxu0 %v1291
  %v1359 = vpop.f32.mrb[0].mxu0
  %v1360 = vadd.f32 %v1288, %v1359
  %v1361 = vpop.f32.mrb[0].mxu0
  %1362 = vdwg.mxu0
  %vm1363 = vcmask 12288
  %1364 = vst.msk [vmem:[%s2] sm:$0x1f] %vm1363, %v1360
  // Predicated region
  $region10: #{pers_model_forward.1} parent=0 // pred_check
    _
  $region11: #{pers_model_forward.1} parent=0 // pred_check_branch
    %1366 = sbr.rel (0) target = $region13
  $region12: #{pers_model_forward.1} parent=0 // pred_region
    _
  $region13: #{pers_model_forward.1} parent=0 // pred_fallthru
    _
  // Predicated region
  $region14: #{pers_model_forward.1} parent=0 // pred_check
    _
  $region15: #{pers_model_forward.1} parent=0 // pred_check_branch
    %1368 = sbr.rel (0) target = $region17
  $region16: #{pers_model_forward.1} parent=0 // pred_region
    _
  $region17: #{pers_model_forward.1} parent=0 // pred_fallthru
    _

</llo_original>
